<compile_context>
chip_gen: v7x
topology: tpu7x:2x2x1
jax: 0.10.0
libtpu: 0.0.40
codegen_flags: <defaults>
</compile_context>

<pallas_src>
import functools

import jax
import jax.numpy as jnp
from jax.experimental import pallas as pl
from jax.experimental.pallas import tpu as pltpu

FEAT_IN = 512
FEAT_DIM = 256
ATTN_D = 128
NEG_INF = -1e30


def _snnmil_kernel(n_valid, tile_n,
                   feat_ref, w1_ref, b1_ref, wvu_ref, bvu_ref, ww_ref,
                   wc_ref, bc_ref,
                   logits_ref, prob_ref, yhat_ref, afeat_ref,
                   m_scr, l_scr, acc_scr):
    step = pl.program_id(0)

    @pl.when(step == 0)
    def _init():
        m_scr[...] = jnp.full_like(m_scr, NEG_INF)
        l_scr[...] = jnp.zeros_like(l_scr)
        acc_scr[...] = jnp.zeros_like(acc_scr)

    # fc1: Linear(512, 256) + ELU. feat / W1 are bf16, accumulation in f32.
    h = jnp.dot(feat_ref[...], w1_ref[...],
                preferred_element_type=jnp.float32) + b1_ref[...]
    # ELU(alpha=1); min() keeps the (discarded) negative branch overflow-free.
    h = jnp.where(h > 0.0, h, jnp.exp(jnp.minimum(h, 0.0)) - 1.0)       # (T,256)

    # Gated attention: single fused (T,256)@(256,256) matmul, then split.
    vu = jnp.dot(h, wvu_ref[...],
                 preferred_element_type=jnp.float32) + bvu_ref[...]     # (T,256)
    gated = jnp.tanh(vu[:, :ATTN_D]) * jax.nn.sigmoid(vu[:, ATTN_D:])   # (T,128)

    # attention scores (bw dropped: softmax is shift-invariant).
    s = jnp.dot(gated, ww_ref[...],
                preferred_element_type=jnp.float32)                     # (T,1)

    # Mask rows past the true bag length (ragged last tile / padding).
    row = step * tile_n + jax.lax.broadcasted_iota(jnp.int32, s.shape, 0)
    s = jnp.where(row < n_valid, s, NEG_INF)

    # Online softmax update of (m, l, acc).
    m_old = m_scr[...]                                                  # (1,1)
    m_new = jnp.maximum(m_old, jnp.max(s, axis=0, keepdims=True))       # (1,1)
    alpha = jnp.exp(m_old - m_new)                                      # (1,1)
    p = jnp.exp(s - m_new)                                              # (T,1)
    l_scr[...] = alpha * l_scr[...] + jnp.sum(p, axis=0, keepdims=True)
    # (1,T)@(T,256) on the MXU: contract both operands over the tile axis.
    partial = jax.lax.dot_general(p, h, (((0,), (0,)), ((), ())),
                                  preferred_element_type=jnp.float32)   # (1,256)
    acc_scr[...] = alpha * acc_scr[...] + partial
    m_scr[...] = m_new

    @pl.when(step == pl.num_programs(0) - 1)
    def _epilogue():
        afeat = acc_scr[...] / l_scr[...]                               # (1,256)
        afeat_ref[...] = afeat

        logits = jnp.dot(afeat, wc_ref[...],
                         preferred_element_type=jnp.float32) + bc_ref[...]
        logits_ref[...] = logits                                        # (1,C)

        lm = jnp.max(logits, axis=-1, keepdims=True)
        le = jnp.exp(logits - lm)
        prob_ref[...] = le / jnp.sum(le, axis=-1, keepdims=True)

        n_cls = logits.shape[-1]
        iota = jax.lax.broadcasted_iota(jnp.int32, logits.shape, 1)
        is_max = logits == lm
        yhat_ref[...] = jnp.min(jnp.where(is_max, iota, n_cls),
                                axis=-1, keepdims=True)


def _round_up(x, m):
    return ((x + m - 1) // m) * m


@functools.partial(jax.jit, static_argnames=("n_classes", "tile_n"))
def snnmil_forward(feat, params, n_classes=2, tile_n=1024):
    """feat: any shape with total size divisible by 512.
    Returns (logits, Y_prob, Y_hat, afeat) matching the PyTorch module."""
    assert tile_n % 16 == 0, "tile_n must be a multiple of 16 (bf16 sublane pack)"
    x = feat.reshape(-1, FEAT_IN)
    n = x.shape[0]

    # Don't pad a tiny bag up to a huge tile; shrink the tile instead.
    tile = min(tile_n, _round_up(n, 16))
    num_tiles = pl.cdiv(n, tile)
    n_pad = num_tiles * tile
    if n_pad != n:
        x = jnp.pad(x, ((0, n_pad - n), (0, 0)))

    # bf16 feat / W1 stream (halves HBM bytes; MXU bf16 with f32 accumulate).
    x = x.astype(jnp.bfloat16)
    w1 = params["w1"].astype(jnp.bfloat16)
    b1 = params["b1"].astype(jnp.float32)
    # Fuse the two gated-attention projections into one 256-wide matmul.
    wvu = jnp.concatenate([params["wv"], params["wu"]], axis=1).astype(jnp.float32)
    bvu = jnp.concatenate([params["bv"], params["bu"]], axis=1).astype(jnp.float32)
    ww = params["ww"].astype(jnp.float32)          # (128, 1) column
    wc = params["wc"].astype(jnp.float32)
    bc = params["bc"].astype(jnp.float32)
    # attention_weights bias (bw) is intentionally dropped: softmax-shift invariant.

    kernel = functools.partial(_snnmil_kernel, n, tile)

    grid_spec = pltpu.PrefetchScalarGridSpec(
        num_scalar_prefetch=0,
        grid=(num_tiles,),
        in_specs=[
            pl.BlockSpec((tile, FEAT_IN), lambda i: (i, 0)),        # feat tile
            pl.BlockSpec((FEAT_IN, FEAT_DIM), lambda i: (0, 0)),    # W1 (resident)
            pl.BlockSpec((1, FEAT_DIM), lambda i: (0, 0)),          # b1
            pl.BlockSpec((FEAT_DIM, 2 * ATTN_D), lambda i: (0, 0)),  # Wv||Wu
            pl.BlockSpec((1, 2 * ATTN_D), lambda i: (0, 0)),        # bv||bu
            pl.BlockSpec((ATTN_D, 1), lambda i: (0, 0)),            # Ww
            pl.BlockSpec((FEAT_DIM, n_classes), lambda i: (0, 0)),  # Wc
            pl.BlockSpec((1, n_classes), lambda i: (0, 0)),         # bc
        ],
        out_specs=(
            pl.BlockSpec((1, n_classes), lambda i: (0, 0)),         # logits
            pl.BlockSpec((1, n_classes), lambda i: (0, 0)),         # Y_prob
            pl.BlockSpec((1, 1), lambda i: (0, 0)),                 # Y_hat
            pl.BlockSpec((1, FEAT_DIM), lambda i: (0, 0)),          # afeat
        ),
        scratch_shapes=[
            pltpu.VMEM((1, 1), jnp.float32),          # running max m
            pltpu.VMEM((1, 1), jnp.float32),          # running denom l
            pltpu.VMEM((1, FEAT_DIM), jnp.float32),   # running sum of a*h
        ],
    )

    out_shapes = (
        jax.ShapeDtypeStruct((1, n_classes), jnp.float32),   # logits
        jax.ShapeDtypeStruct((1, n_classes), jnp.float32),   # Y_prob
        jax.ShapeDtypeStruct((1, 1), jnp.int32),             # Y_hat (2-D)
        jax.ShapeDtypeStruct((1, FEAT_DIM), jnp.float32),    # afeat
    )

    logits, y_prob, y_hat2d, afeat = pl.pallas_call(
        kernel,
        out_shape=out_shapes,
        grid_spec=grid_spec,
        compiler_params=pltpu.CompilerParams(
            dimension_semantics=("arbitrary",),     # N axis is a reduction
            vmem_limit_bytes=32 * 1024 * 1024,
        ),
    )(x, w1, b1, wvu, bvu, ww, wc, bc)

    y_hat = y_hat2d.reshape(1)   # torch argmax over dim=1 of (1, C) -> shape (1,)
    return logits, y_prob, y_hat, afeat


def init_params(key, n_classes=2):
    """Deterministic synthetic weights (shapes from the module __init__).
    Weight matrices are stored transposed: (in_features, out_features)."""
    ks = jax.random.split(key, 10)

    def lin(kw, kb, fan_in, fan_out):
        std = 1.0 / jnp.sqrt(jnp.float32(fan_in))
        w = jax.random.normal(kw, (fan_in, fan_out), jnp.float32) * std
        b = jax.random.normal(kb, (1, fan_out), jnp.float32) * 0.02
        return w, b

    w1, b1 = lin(ks[0], ks[1], FEAT_IN, FEAT_DIM)     # fc1.Linear(512, 256)
    wv, bv = lin(ks[2], ks[3], FEAT_DIM, ATTN_D)      # attention_V.Linear(256, 128)
    wu, bu = lin(ks[4], ks[5], FEAT_DIM, ATTN_D)      # attention_U.Linear(256, 128)
    ww, _ = lin(ks[6], ks[7], ATTN_D, 1)              # attention_weights.Linear(128, 1)
    wc, bc = lin(ks[8], ks[9], FEAT_DIM, n_classes)   # Classifier_1fc.Linear(256, C)

    # attention_weights bias omitted: forward output is invariant to it.
    return dict(w1=w1, b1=b1, wv=wv, bv=bv, wu=wu, bu=bu, ww=ww, wc=wc, bc=bc)


def _reference_forward(feat, params):
    """Pure-JAX reference (emulates the kernel's bf16 feat/W1 rounding)."""
    hp = jax.lax.Precision.HIGHEST
    x = feat.reshape(-1, FEAT_IN).astype(jnp.float32)
    xb = x.astype(jnp.bfloat16).astype(jnp.float32)
    w1b = params["w1"].astype(jnp.bfloat16).astype(jnp.float32)
    h = jnp.dot(xb, w1b, precision=hp) + params["b1"]
    h = jnp.where(h > 0.0, h, jnp.exp(jnp.minimum(h, 0.0)) - 1.0)
    a_v = jnp.tanh(jnp.dot(h, params["wv"], precision=hp) + params["bv"])
    a_u = jax.nn.sigmoid(jnp.dot(h, params["wu"], precision=hp) + params["bu"])
    s = jnp.dot(a_v * a_u, params["ww"], precision=hp)          # (N, 1)
    a = jax.nn.softmax(s, axis=0)
    afeat = jnp.sum(a * h, axis=0, keepdims=True)               # (1, 256)
    logits = jnp.dot(afeat, params["wc"], precision=hp) + params["bc"]
    return (logits, jax.nn.softmax(logits, axis=-1),
            jnp.argmax(logits, axis=-1), afeat)


def _check(outs, refs, n_classes):
    logits, y_prob, y_hat, afeat = outs
    r_logits, r_prob, r_yhat, r_afeat = refs
    assert logits.shape == (1, n_classes) and y_prob.shape == (1, n_classes)
    assert y_hat.shape == (1,) and afeat.shape == (1, FEAT_DIM)
    assert jnp.allclose(logits, r_logits, atol=5e-3, rtol=5e-3)
    assert jnp.allclose(y_prob, r_prob, atol=2e-3, rtol=2e-3)
    assert jnp.allclose(afeat, r_afeat, atol=5e-3, rtol=5e-3)
    assert int(y_hat[0]) == int(r_yhat[0])


if __name__ == "__main__":
    key = jax.random.PRNGKey(0)
    k_feat1, k_feat2, k_param = jax.random.split(key, 3)
    params = init_params(k_param, n_classes=2)

    # Case 1: multi-tile bag with a ragged last tile (exercises the online
    # softmax, masking and tile pipeline) at small shapes.
    n1 = 300
    feat1 = jax.random.normal(k_feat1, (n1, FEAT_IN), jnp.float32)
    out1 = snnmil_forward(feat1, params, n_classes=2, tile_n=128)
    jax.block_until_ready(out1)
    _check(out1, _reference_forward(feat1, params), n_classes=2)

    # Case 2: bag smaller than one tile (single grid step, internal padding).
    n2 = 64
    feat2 = jax.random.normal(k_feat2, (n2, FEAT_IN), jnp.float32)
    out2 = snnmil_forward(feat2, params, n_classes=2)   # default tile_n=1024
    jax.block_until_ready(out2)
    _check(out2, _reference_forward(feat2, params), n_classes=2)

    print("KERNEL_OK")
</pallas_src>

<mosaic_0001>
module attributes {stable_mosaic.version = 11 : i64} {
  func.func @_snnmil_kernel(%arg0: i32, %arg1: memref<128x512xbf16, #tpu.memory_space<vmem>>, %arg2: memref<512x256xbf16, #tpu.memory_space<vmem>>, %arg3: memref<1x256xf32, #tpu.memory_space<vmem>>, %arg4: memref<256x256xf32, #tpu.memory_space<vmem>>, %arg5: memref<1x256xf32, #tpu.memory_space<vmem>>, %arg6: memref<128x1xf32, #tpu.memory_space<vmem>>, %arg7: memref<256x2xf32, #tpu.memory_space<vmem>>, %arg8: memref<1x2xf32, #tpu.memory_space<vmem>>, %arg9: memref<1x2xf32, #tpu.memory_space<vmem>>, %arg10: memref<1x2xf32, #tpu.memory_space<vmem>>, %arg11: memref<1x1xi32, #tpu.memory_space<vmem>>, %arg12: memref<1x256xf32, #tpu.memory_space<vmem>>, %arg13: memref<1x1xf32, #tpu.memory_space<vmem>>, %arg14: memref<1x1xf32, #tpu.memory_space<vmem>>, %arg15: memref<1x256xf32, #tpu.memory_space<vmem>>) attributes {dimension_semantics = [#tpu.dimension_semantics<arbitrary>], iteration_bounds = array<i64: 3>, scalar_prefetch = 0 : i64, scratch_operands = 3 : i64, tpu.core_type = #tpu.core_type<tc>, window_params = [{transform_indices = @transform_0, window_bounds = array<i64: 128, 512>}, {pipeline_mode = #tpu.pipeline_mode<synchronous>, transform_indices = @transform_1, window_bounds = array<i64: 512, 256>}, {pipeline_mode = #tpu.pipeline_mode<synchronous>, transform_indices = @transform_2, window_bounds = array<i64: 1, 256>}, {pipeline_mode = #tpu.pipeline_mode<synchronous>, transform_indices = @transform_3, window_bounds = array<i64: 256, 256>}, {pipeline_mode = #tpu.pipeline_mode<synchronous>, transform_indices = @transform_4, window_bounds = array<i64: 1, 256>}, {pipeline_mode = #tpu.pipeline_mode<synchronous>, transform_indices = @transform_5, window_bounds = array<i64: 128, 1>}, {pipeline_mode = #tpu.pipeline_mode<synchronous>, transform_indices = @transform_6, window_bounds = array<i64: 256, 2>}, {pipeline_mode = #tpu.pipeline_mode<synchronous>, transform_indices = @transform_7, window_bounds = array<i64: 1, 2>}, {pipeline_mode = #tpu.pipeline_mode<synchronous>, transform_indices = @transform_8, window_bounds = array<i64: 1, 2>}, {pipeline_mode = #tpu.pipeline_mode<synchronous>, transform_indices = @transform_9, window_bounds = array<i64: 1, 2>}, {pipeline_mode = #tpu.pipeline_mode<synchronous>, transform_indices = @transform_10, window_bounds = array<i64: 1, 1>}, {pipeline_mode = #tpu.pipeline_mode<synchronous>, transform_indices = @transform_11, window_bounds = array<i64: 1, 256>}]} {
    %c0_i32 = arith.constant 0 : i32
    %0 = arith.cmpi eq, %arg0, %c0_i32 : i32
    %1 = arith.extui %0 : i1 to i32
    %c0_i32_0 = arith.constant 0 : i32
    %2 = arith.cmpi ne, %1, %c0_i32_0 : i32
    scf.if %2 {
      %cst_35 = arith.constant -1.000000e+30 : f32
      %66 = vector.broadcast %cst_35 : f32 to vector<1x1xf32>
      %c0_36 = arith.constant 0 : index
      %c0_37 = arith.constant 0 : index
      %67 = vector.load %arg13[%c0_36, %c0_37] : memref<1x1xf32, #tpu.memory_space<vmem>>, vector<1x1xf32>
      tpu.vector_store %arg13[%c0_36, %c0_37], %66 {strides = array<i32>} : memref<1x1xf32, #tpu.memory_space<vmem>>, vector<1x1xf32>,
      %cst_38 = arith.constant 0.000000e+00 : f32
      %68 = vector.broadcast %cst_38 : f32 to vector<1x1xf32>
      %c0_39 = arith.constant 0 : index
      %c0_40 = arith.constant 0 : index
      %69 = vector.load %arg14[%c0_39, %c0_40] : memref<1x1xf32, #tpu.memory_space<vmem>>, vector<1x1xf32>
      tpu.vector_store %arg14[%c0_39, %c0_40], %68 {strides = array<i32>} : memref<1x1xf32, #tpu.memory_space<vmem>>, vector<1x1xf32>,
      %cst_41 = arith.constant 0.000000e+00 : f32
      %70 = vector.broadcast %cst_41 : f32 to vector<1x256xf32>
      %c0_42 = arith.constant 0 : index
      %c0_43 = arith.constant 0 : index
      %71 = vector.load %arg15[%c0_42, %c0_43] : memref<1x256xf32, #tpu.memory_space<vmem>>, vector<1x256xf32>
      tpu.vector_store %arg15[%c0_42, %c0_43], %70 {strides = array<i32>} : memref<1x256xf32, #tpu.memory_space<vmem>>, vector<1x256xf32>,
    } else {
    }
    %c0 = arith.constant 0 : index
    %c0_1 = arith.constant 0 : index
    %3 = vector.load %arg1[%c0, %c0_1] : memref<128x512xbf16, #tpu.memory_space<vmem>>, vector<128x512xbf16>
    %c0_2 = arith.constant 0 : index
    %c0_3 = arith.constant 0 : index
    %4 = vector.load %arg2[%c0_2, %c0_3] : memref<512x256xbf16, #tpu.memory_space<vmem>>, vector<512x256xbf16>
    %cst = arith.constant dense<0.000000e+00> : vector<128x256xf32>
    %5 = tpu.matmul %3, %4, %cst {dimension_numbers = #tpu.dot_dimension_numbers<[1], [0], [0], [1], [0, 0, 1, 1], [], []>} : vector<128x512xbf16>, vector<512x256xbf16>, vector<128x256xf32> -> vector<128x256xf32>
    %c0_4 = arith.constant 0 : index
    %c0_5 = arith.constant 0 : index
    %6 = vector.load %arg3[%c0_4, %c0_5] : memref<1x256xf32, #tpu.memory_space<vmem>>, vector<1x256xf32>
    %7 = vector.broadcast %6 : vector<1x256xf32> to vector<128x256xf32>
    %8 = arith.addf %5, %7 : vector<128x256xf32>
    %cst_6 = arith.constant 0.000000e+00 : f32
    %9 = vector.broadcast %cst_6 : f32 to vector<128x256xf32>
    %10 = arith.cmpf ogt, %8, %9 : vector<128x256xf32>
    %cst_7 = arith.constant 0.000000e+00 : f32
    %11 = vector.broadcast %cst_7 : f32 to vector<128x256xf32>
    %12 = arith.minimumf %8, %11 : vector<128x256xf32>
    %13 = math.exp %12 : vector<128x256xf32>
    %cst_8 = arith.constant 1.000000e+00 : f32
    %14 = vector.broadcast %cst_8 : f32 to vector<128x256xf32>
    %15 = arith.subf %13, %14 : vector<128x256xf32>
    %16 = arith.select %10, %8, %15 : vector<128x256xi1>, vector<128x256xf32>
    %c0_9 = arith.constant 0 : index
    %c0_10 = arith.constant 0 : index
    %17 = vector.load %arg4[%c0_9, %c0_10] : memref<256x256xf32, #tpu.memory_space<vmem>>, vector<256x256xf32>
    %cst_11 = arith.constant dense<0.000000e+00> : vector<128x256xf32>
    %18 = tpu.matmul %16, %17, %cst_11 {dimension_numbers = #tpu.dot_dimension_numbers<[1], [0], [0], [1], [0, 0, 1, 1], [], []>} : vector<128x256xf32>, vector<256x256xf32>, vector<128x256xf32> -> vector<128x256xf32>
    %c0_12 = arith.constant 0 : index
    %c0_13 = arith.constant 0 : index
    %19 = vector.load %arg5[%c0_12, %c0_13] : memref<1x256xf32, #tpu.memory_space<vmem>>, vector<1x256xf32>
    %20 = vector.broadcast %19 : vector<1x256xf32> to vector<128x256xf32>
    %21 = arith.addf %18, %20 : vector<128x256xf32>
    %22 = vector.extract_strided_slice %21 {offsets = [0, 0], sizes = [128, 128], strides = [1, 1]} : vector<128x256xf32> to vector<128x128xf32>
    %23 = math.tanh %22 : vector<128x128xf32>
    %24 = vector.extract_strided_slice %21 {offsets = [0, 128], sizes = [128, 128], strides = [1, 1]} : vector<128x256xf32> to vector<128x128xf32>
    %25 = arith.negf %24 : vector<128x128xf32>
    %26 = math.exp %25 : vector<128x128xf32>
    %cst_14 = arith.constant 1.000000e+00 : f32
    %27 = vector.broadcast %cst_14 : f32 to vector<128x128xf32>
    %28 = arith.addf %27, %26 : vector<128x128xf32>
    %29 = arith.divf %27, %28 : vector<128x128xf32>
    %30 = arith.mulf %23, %29 : vector<128x128xf32>
    %c0_15 = arith.constant 0 : index
    %c0_16 = arith.constant 0 : index
    %31 = vector.load %arg6[%c0_15, %c0_16] : memref<128x1xf32, #tpu.memory_space<vmem>>, vector<128x1xf32>
    %cst_17 = arith.constant dense<0.000000e+00> : vector<128x1xf32>
    %32 = tpu.matmul %30, %31, %cst_17 {dimension_numbers = #tpu.dot_dimension_numbers<[1], [0], [0], [1], [0, 0, 1, 1], [], []>} : vector<128x128xf32>, vector<128x1xf32>, vector<128x1xf32> -> vector<128x1xf32>
    %c128_i32 = arith.constant 128 : i32
    %33 = arith.muli %arg0, %c128_i32 : i32
    %34 = tpu.iota {dimensions = array<i32: 0>} : vector<128x1xi32>
    %35 = vector.broadcast %33 : i32 to vector<128x1xi32>
    %36 = arith.addi %35, %34 : vector<128x1xi32>
    %c300_i32 = arith.constant 300 : i32
    %37 = vector.broadcast %c300_i32 : i32 to vector<128x1xi32>
    %38 = arith.cmpi slt, %36, %37 : vector<128x1xi32>
    %cst_18 = arith.constant -1.000000e+30 : f32
    %39 = vector.broadcast %cst_18 : f32 to vector<128x1xf32>
    %40 = arith.select %38, %32, %39 : vector<128x1xi1>, vector<128x1xf32>
    %c0_19 = arith.constant 0 : index
    %c0_20 = arith.constant 0 : index
    %41 = vector.load %arg13[%c0_19, %c0_20] : memref<1x1xf32, #tpu.memory_space<vmem>>, vector<1x1xf32>
    %cst_21 = arith.constant dense<0xFF800000> : vector<1xf32>
    %42 = vector.multi_reduction <maximumf>, %40, %cst_21 [0] : vector<128x1xf32> to vector<1xf32>
    %43 = vector.shape_cast %42 : vector<1xf32> to vector<1x1xf32>
    %44 = arith.maximumf %41, %43 : vector<1x1xf32>
    %45 = arith.subf %41, %44 : vector<1x1xf32>
    %46 = math.exp %45 : vector<1x1xf32>
    %47 = vector.broadcast %44 : vector<1x1xf32> to vector<128x1xf32>
    %48 = arith.subf %40, %47 : vector<128x1xf32>
    %49 = math.exp %48 : vector<128x1xf32>
    %c0_22 = arith.constant 0 : index
    %c0_23 = arith.constant 0 : index
    %50 = vector.load %arg14[%c0_22, %c0_23] : memref<1x1xf32, #tpu.memory_space<vmem>>, vector<1x1xf32>
    %51 = arith.mulf %46, %50 : vector<1x1xf32>
    %cst_24 = arith.constant dense<0.000000e+00> : vector<1xf32>
    %52 = vector.multi_reduction <add>, %49, %cst_24 [0] : vector<128x1xf32> to vector<1xf32>
    %53 = vector.shape_cast %52 : vector<1xf32> to vector<1x1xf32>
    %54 = arith.addf %51, %53 : vector<1x1xf32>
    %c0_25 = arith.constant 0 : index
    %c0_26 = arith.constant 0 : index
    %55 = vector.load %arg14[%c0_25, %c0_26] : memref<1x1xf32, #tpu.memory_space<vmem>>, vector<1x1xf32>
    tpu.vector_store %arg14[%c0_25, %c0_26], %54 {strides = array<i32>} : memref<1x1xf32, #tpu.memory_space<vmem>>, vector<1x1xf32>,
    %cst_27 = arith.constant dense<0.000000e+00> : vector<1x256xf32>
    %56 = tpu.matmul %49, %16, %cst_27 {dimension_numbers = #tpu.dot_dimension_numbers<[0], [0], [1], [1], [0, 1, 1, 1], [], []>} : vector<128x1xf32>, vector<128x256xf32>, vector<1x256xf32> -> vector<1x256xf32>
    %c0_28 = arith.constant 0 : index
    %c0_29 = arith.constant 0 : index
    %57 = vector.load %arg15[%c0_28, %c0_29] : memref<1x256xf32, #tpu.memory_space<vmem>>, vector<1x256xf32>
    %58 = vector.broadcast %46 : vector<1x1xf32> to vector<1x256xf32>
    %59 = arith.mulf %58, %57 : vector<1x256xf32>
    %60 = arith.addf %59, %56 : vector<1x256xf32>
    %c0_30 = arith.constant 0 : index
    %c0_31 = arith.constant 0 : index
    %61 = vector.load %arg15[%c0_30, %c0_31] : memref<1x256xf32, #tpu.memory_space<vmem>>, vector<1x256xf32>
    tpu.vector_store %arg15[%c0_30, %c0_31], %60 {strides = array<i32>} : memref<1x256xf32, #tpu.memory_space<vmem>>, vector<1x256xf32>,
    %c0_32 = arith.constant 0 : index
    %c0_33 = arith.constant 0 : index
    %62 = vector.load %arg13[%c0_32, %c0_33] : memref<1x1xf32, #tpu.memory_space<vmem>>, vector<1x1xf32>
    tpu.vector_store %arg13[%c0_32, %c0_33], %44 {strides = array<i32>} : memref<1x1xf32, #tpu.memory_space<vmem>>, vector<1x1xf32>,
    %c2_i32 = arith.constant 2 : i32
    %63 = arith.cmpi eq, %arg0, %c2_i32 : i32
    %64 = arith.extui %63 : i1 to i32
    %c0_i32_34 = arith.constant 0 : i32
    %65 = arith.cmpi ne, %64, %c0_i32_34 : i32
    scf.if %65 {
      %c0_35 = arith.constant 0 : index
      %c0_36 = arith.constant 0 : index
      %66 = vector.load %arg15[%c0_35, %c0_36] : memref<1x256xf32, #tpu.memory_space<vmem>>, vector<1x256xf32>
      %c0_37 = arith.constant 0 : index
      %c0_38 = arith.constant 0 : index
      %67 = vector.load %arg14[%c0_37, %c0_38] : memref<1x1xf32, #tpu.memory_space<vmem>>, vector<1x1xf32>
      %68 = vector.broadcast %67 : vector<1x1xf32> to vector<1x256xf32>
      %69 = arith.divf %66, %68 : vector<1x256xf32>
      %c0_39 = arith.constant 0 : index
      %c0_40 = arith.constant 0 : index
      %70 = vector.load %arg12[%c0_39, %c0_40] : memref<1x256xf32, #tpu.memory_space<vmem>>, vector<1x256xf32>
      tpu.vector_store %arg12[%c0_39, %c0_40], %69 {strides = array<i32>} : memref<1x256xf32, #tpu.memory_space<vmem>>, vector<1x256xf32>,
      %c0_41 = arith.constant 0 : index
      %c0_42 = arith.constant 0 : index
      %71 = vector.load %arg7[%c0_41, %c0_42] : memref<256x2xf32, #tpu.memory_space<vmem>>, vector<256x2xf32>
      %cst_43 = arith.constant dense<0.000000e+00> : vector<1x2xf32>
      %72 = tpu.matmul %69, %71, %cst_43 {dimension_numbers = #tpu.dot_dimension_numbers<[1], [0], [0], [1], [0, 0, 1, 1], [], []>} : vector<1x256xf32>, vector<256x2xf32>, vector<1x2xf32> -> vector<1x2xf32>
      %c0_44 = arith.constant 0 : index
      %c0_45 = arith.constant 0 : index
      %73 = vector.load %arg8[%c0_44, %c0_45] : memref<1x2xf32, #tpu.memory_space<vmem>>, vector<1x2xf32>
      %74 = arith.addf %72, %73 : vector<1x2xf32>
      %c0_46 = arith.constant 0 : index
      %c0_47 = arith.constant 0 : index
      %75 = vector.load %arg9[%c0_46, %c0_47] : memref<1x2xf32, #tpu.memory_space<vmem>>, vector<1x2xf32>
      tpu.vector_store %arg9[%c0_46, %c0_47], %74 {strides = array<i32>} : memref<1x2xf32, #tpu.memory_space<vmem>>, vector<1x2xf32>,
      %cst_48 = arith.constant dense<0xFF800000> : vector<1xf32>
      %76 = vector.multi_reduction <maximumf>, %74, %cst_48 [1] : vector<1x2xf32> to vector<1xf32>
      %77 = vector.shape_cast %76 : vector<1xf32> to vector<1x1xf32>
      %78 = vector.broadcast %77 : vector<1x1xf32> to vector<1x2xf32>
      %79 = arith.subf %74, %78 : vector<1x2xf32>
      %80 = math.exp %79 : vector<1x2xf32>
      %cst_49 = arith.constant dense<0.000000e+00> : vector<1xf32>
      %81 = vector.multi_reduction <add>, %80, %cst_49 [1] : vector<1x2xf32> to vector<1xf32>
      %82 = vector.shape_cast %81 : vector<1xf32> to vector<1x1xf32>
      %83 = vector.broadcast %82 : vector<1x1xf32> to vector<1x2xf32>
      %84 = arith.divf %80, %83 : vector<1x2xf32>
      %c0_50 = arith.constant 0 : index
      %c0_51 = arith.constant 0 : index
      %85 = vector.load %arg10[%c0_50, %c0_51] : memref<1x2xf32, #tpu.memory_space<vmem>>, vector<1x2xf32>
      tpu.vector_store %arg10[%c0_50, %c0_51], %84 {strides = array<i32>} : memref<1x2xf32, #tpu.memory_space<vmem>>, vector<1x2xf32>,
      %86 = tpu.iota {dimensions = array<i32: 1>} : vector<1x2xi32>
      %87 = vector.broadcast %77 : vector<1x1xf32> to vector<1x2xf32>
      %88 = arith.cmpf oeq, %74, %87 : vector<1x2xf32>
      %c2_i32_52 = arith.constant 2 : i32
      %89 = vector.broadcast %c2_i32_52 : i32 to vector<1x2xi32>
      %90 = arith.select %88, %86, %89 : vector<1x2xi1>, vector<1x2xi32>
      %cst_53 = arith.constant dense<2147483647> : vector<1xi32>
      %91 = vector.multi_reduction <minsi>, %90, %cst_53 [1] : vector<1x2xi32> to vector<1xi32>
      %92 = vector.shape_cast %91 : vector<1xi32> to vector<1x1xi32>
      %c0_54 = arith.constant 0 : index
      %c0_55 = arith.constant 0 : index
      %93 = vector.load %arg11[%c0_54, %c0_55] : memref<1x1xi32, #tpu.memory_space<vmem>>, vector<1x1xi32>
      tpu.vector_store %arg11[%c0_54, %c0_55], %92 {strides = array<i32>} : memref<1x1xi32, #tpu.memory_space<vmem>>, vector<1x1xi32>,
    } else {
    }
    return
  }
  func.func @transform_0(%arg0: i32) -> (i32, i32) {
    %c0_i32 = arith.constant 0 : i32
    %c0_i32_0 = arith.constant 0 : i32
    return %arg0, %c0_i32 : i32, i32
  }
  func.func @transform_1(%arg0: i32) -> (i32, i32) {
    %c0_i32 = arith.constant 0 : i32
    %c0_i32_0 = arith.constant 0 : i32
    %c0_i32_1 = arith.constant 0 : i32
    return %c0_i32, %c0_i32_0 : i32, i32
  }
  func.func @transform_2(%arg0: i32) -> (i32, i32) {
    %c0_i32 = arith.constant 0 : i32
    %c0_i32_0 = arith.constant 0 : i32
    %c0_i32_1 = arith.constant 0 : i32
    return %c0_i32, %c0_i32_0 : i32, i32
  }
  func.func @transform_3(%arg0: i32) -> (i32, i32) {
    %c0_i32 = arith.constant 0 : i32
    %c0_i32_0 = arith.constant 0 : i32
    %c0_i32_1 = arith.constant 0 : i32
    return %c0_i32, %c0_i32_0 : i32, i32
  }
  func.func @transform_4(%arg0: i32) -> (i32, i32) {
    %c0_i32 = arith.constant 0 : i32
    %c0_i32_0 = arith.constant 0 : i32
    %c0_i32_1 = arith.constant 0 : i32
    return %c0_i32, %c0_i32_0 : i32, i32
  }
  func.func @transform_5(%arg0: i32) -> (i32, i32) {
    %c0_i32 = arith.constant 0 : i32
    %c0_i32_0 = arith.constant 0 : i32
    %c0_i32_1 = arith.constant 0 : i32
    return %c0_i32, %c0_i32_0 : i32, i32
  }
  func.func @transform_6(%arg0: i32) -> (i32, i32) {
    %c0_i32 = arith.constant 0 : i32
    %c0_i32_0 = arith.constant 0 : i32
    %c0_i32_1 = arith.constant 0 : i32
    return %c0_i32, %c0_i32_0 : i32, i32
  }
  func.func @transform_7(%arg0: i32) -> (i32, i32) {
    %c0_i32 = arith.constant 0 : i32
    %c0_i32_0 = arith.constant 0 : i32
    %c0_i32_1 = arith.constant 0 : i32
    return %c0_i32, %c0_i32_0 : i32, i32
  }
  func.func @transform_8(%arg0: i32) -> (i32, i32) {
    %c0_i32 = arith.constant 0 : i32
    %c0_i32_0 = arith.constant 0 : i32
    %c0_i32_1 = arith.constant 0 : i32
    return %c0_i32, %c0_i32_0 : i32, i32
  }
  func.func @transform_9(%arg0: i32) -> (i32, i32) {
    %c0_i32 = arith.constant 0 : i32
    %c0_i32_0 = arith.constant 0 : i32
    %c0_i32_1 = arith.constant 0 : i32
    return %c0_i32, %c0_i32_0 : i32, i32
  }
  func.func @transform_10(%arg0: i32) -> (i32, i32) {
    %c0_i32 = arith.constant 0 : i32
    %c0_i32_0 = arith.constant 0 : i32
    %c0_i32_1 = arith.constant 0 : i32
    return %c0_i32, %c0_i32_0 : i32, i32
  }
  func.func @transform_11(%arg0: i32) -> (i32, i32) {
    %c0_i32 = arith.constant 0 : i32
    %c0_i32_0 = arith.constant 0 : i32
    %c0_i32_1 = arith.constant 0 : i32
    return %c0_i32, %c0_i32_0 : i32, i32
  }
}

</mosaic_0001>

<llo_original>
// kernel: snnmil_forward.1
$region0: #{snnmil_forward.1}
  #allocation0 [shape = 'u32[]', space=smem, size = 0x4, offset = 0x4, fixed_abs, tag = 'smem constant byte address 0x4 - core index']
  #allocation1 [shape = 'u32[144,128]{1,0:T(1,128)}', space=vmem, size = 0x12000, scoped, tag = 'internal scratch']
  #allocation2 [shape = 'f32[1,1]{1,0:T(1,128)}', space=vmem, size = 0x200, scoped, tag = 'scratch operand']
  #allocation3 [shape = 'f32[1,1]{1,0:T(1,128)}', space=vmem, size = 0x200, scoped, tag = 'scratch operand']
  #allocation4 [shape = 'f32[1,256]{1,0:T(1,128)}', space=vmem, size = 0x400, scoped, tag = 'scratch operand']
  %s0 = inlined_call_operand.vmem [shape: bf16[384,512], index: 0, kind: input, shape index: {}]
  %s1 = inlined_call_operand.vmem [shape: bf16[512,256], index: 1, kind: input, shape index: {}]
  %s2 = inlined_call_operand.vmem [shape: f32[1,256], index: 2, kind: input, shape index: {}]
  %s3 = inlined_call_operand.vmem [shape: f32[256,256], index: 3, kind: input, shape index: {}]
  %s4 = inlined_call_operand.vmem [shape: f32[1,256], index: 4, kind: input, shape index: {}]
  %s5 = inlined_call_operand.vmem [shape: f32[128,1], index: 5, kind: input, shape index: {}]
  %s6 = inlined_call_operand.vmem [shape: f32[256,2], index: 6, kind: input, shape index: {}]
  %s7 = inlined_call_operand.vmem [shape: f32[1,2], index: 7, kind: input, shape index: {}]
  %s8 = inlined_call_operand.hbm [shape: f32[1,2], index: 8, kind: output, shape index: {0}]
  %s9 = inlined_call_operand.hbm [shape: f32[1,2], index: 9, kind: output, shape index: {1}]
  %s10 = inlined_call_operand.hbm [shape: s32[1,1], index: 10, kind: output, shape index: {2}]
  %s11 = inlined_call_operand.hbm [shape: f32[1,256], index: 11, kind: output, shape index: {3}]
  %12 = xla_tuple %s8, %s9, %s10, %s11
  %s13 = sld [smem:[#allocation0]]
  $region97: #{snnmil_forward.1} parent=0
    _
  %s15 = ssub.s32 1, %s13
  %s16 = scalar_select 0, %s15, %s13
  $region1: #{snnmil_forward.1} parent=0
    #allocation5 [shape = 'u8[512]{0}', space=vmem, size = 0x400, scoped, tag = 'output window, operand 0, single buffered']
    #allocation6 [shape = 's32[2]{0}', space=sflag, size = 0x8, scoped, tag = 'scoped memory for snnmil_forward.1']
    #allocation7 [shape = 'u8[512]{0}', space=vmem, size = 0x400, scoped, tag = 'output window, operand 1, single buffered']
    #allocation8 [shape = 's32[1]{0}', space=sflag, size = 0x4, scoped, tag = 'scoped memory for snnmil_forward.1']
    #allocation9 [shape = 'u8[512]{0}', space=vmem, size = 0x400, scoped, tag = 'output window, operand 2, single buffered']
    #allocation10 [shape = 'u8[1024]{0}', space=vmem, size = 0x400, scoped, tag = 'output window, operand 3, single buffered']
    #allocation11 [shape = 's32[1]{0}', space=sflag, size = 0x4, scoped, tag = 'scoped memory for snnmil_forward.1']
    %17 = vsyncpa [#allocation6], 0
    %18 = vsyncpa [#allocation8], 0
    %19 = vsyncpa [#allocation11], 0
    loop: start=0, step=1, limit=5
    $region2: #{snnmil_forward.1} parent=1 // loop_pre_header
      _
    $region3: #{snnmil_forward.1} parent=1 // loop_header
      %s21 = sphi 0, %s25
      %p22 = scmp.ge.s32.totalorder %s21, 5
      %s31 = sphi 0, %s33
      %s34 = sphi 0, %s31
      %s35 = sphi 0, %s34
      %s51 = sphi 0, %s35
      %s55 = sphi 0, %s55
      %s57 = sphi 0, %s55
      %s58 = sphi 0, %s57
      %s72 = sphi 0, %s58
      %s76 = sphi 0, %s76
      %s78 = sphi 0, %s76
      %s79 = sphi 0, %s78
      %s93 = sphi 0, %s79
      %s97 = sphi 0, %s97
      %s99 = sphi 0, %s97
      %s100 = sphi 0, %s99
      %s114 = sphi 0, %s100
      %s118 = sphi 0, %s118
      %s120 = sphi 0, %s118
      %s121 = sphi 0, %s120
      %s135 = sphi 0, %s121
      %s139 = sphi 0, %s139
      %s141 = sphi 0, %s139
      %s142 = sphi 0, %s141
      %s156 = sphi 0, %s142
      %s160 = sphi 0, %s160
      %s162 = sphi 0, %s160
      %s163 = sphi 0, %s162
      %s177 = sphi 0, %s163
      %s181 = sphi 0, %s181
      %s183 = sphi 0, %s181
      %s184 = sphi 0, %s183
      %s198 = sphi 0, %s184
      %s202 = sphi 0, %s202
      %s204 = sphi 0, %s202
      %s205 = sphi 0, %s204
      %s219 = sphi 0, %s205
      %s223 = sphi 0, %s223
      %s225 = sphi 0, %s223
      %s226 = sphi 0, %s225
      %s240 = sphi 0, %s226
      %s244 = sphi 0, %s244
      %s246 = sphi 0, %s244
      %s247 = sphi 0, %s246
      %s261 = sphi 0, %s247
      %s265 = sphi 0, %s265
      %s267 = sphi 0, %s265
      %s268 = sphi 0, %s267
      %s282 = sphi 0, %s268
    $region4: #{snnmil_forward.1} parent=1 // loop_header_branch
      %24 = sbr.rel (%p22) target = $region8
    $region5: #{snnmil_forward.1} parent=1 // loop_body
      %s26 = ssub.s32 %s21, 1
      %s27 = ssub.s32 %s21, 2
      %s28 = sadd.s32 %s21, 1
      %s29 = ssub.s32 %s21, %s28
      %p30 = scmp.eq.s32.totalorder %s29, 0
      %s32 = sadd.s32 %s31, 1
      %s33 = scalar_select %p30, %s31, %s32
      %p36 = pneg %p30
      %p37 = scmp.eq.s32.totalorder %s21, 2
      %p38 = por %p36, %p37
      %p39 = scmp.ne.s32.totalorder %s31, %s34
      %p40 = scmp.eq.s32.totalorder %s21, 0
      %p41 = por %p39, %p40
      %p42 = scmp.ne.s32.totalorder %s31, %s34
      %p43 = scmp.eq.s32.totalorder %s26, 2
      %p44 = por %p42, %p43
      %p45 = scmp.ne.s32.totalorder %s34, %s35
      %p46 = scmp.eq.s32.totalorder %s26, 0
      %p47 = por %p45, %p46
      %p48 = scmp.ne.s32.totalorder %s34, %s35
      %p49 = scmp.eq.s32.totalorder %s27, 2
      %p50 = por %p48, %p49
      %p52 = scmp.ne.s32.totalorder %s35, %s51
      %p53 = scmp.eq.s32.totalorder %s27, 0
      %p54 = por %p52, %p53
      %s56 = sadd.s32 %s55, 1
      %p59 = scmp.eq.s32.totalorder %s21, 2
      %p60 = scmp.ne.s32.totalorder %s55, %s57
      %p61 = scmp.eq.s32.totalorder %s21, 0
      %p62 = por %p60, %p61
      %p63 = scmp.ne.s32.totalorder %s55, %s57
      %p64 = scmp.eq.s32.totalorder %s26, 2
      %p65 = por %p63, %p64
      %p66 = scmp.ne.s32.totalorder %s57, %s58
      %p67 = scmp.eq.s32.totalorder %s26, 0
      %p68 = por %p66, %p67
      %p69 = scmp.ne.s32.totalorder %s57, %s58
      %p70 = scmp.eq.s32.totalorder %s27, 2
      %p71 = por %p69, %p70
      %p73 = scmp.ne.s32.totalorder %s58, %s72
      %p74 = scmp.eq.s32.totalorder %s27, 0
      %p75 = por %p73, %p74
      %s77 = sadd.s32 %s76, 1
      %p80 = scmp.eq.s32.totalorder %s21, 2
      %p81 = scmp.ne.s32.totalorder %s76, %s78
      %p82 = scmp.eq.s32.totalorder %s21, 0
      %p83 = por %p81, %p82
      %p84 = scmp.ne.s32.totalorder %s76, %s78
      %p85 = scmp.eq.s32.totalorder %s26, 2
      %p86 = por %p84, %p85
      %p87 = scmp.ne.s32.totalorder %s78, %s79
      %p88 = scmp.eq.s32.totalorder %s26, 0
      %p89 = por %p87, %p88
      %p90 = scmp.ne.s32.totalorder %s78, %s79
      %p91 = scmp.eq.s32.totalorder %s27, 2
      %p92 = por %p90, %p91
      %p94 = scmp.ne.s32.totalorder %s79, %s93
      %p95 = scmp.eq.s32.totalorder %s27, 0
      %p96 = por %p94, %p95
      %s98 = sadd.s32 %s97, 1
      %p101 = scmp.eq.s32.totalorder %s21, 2
      %p102 = scmp.ne.s32.totalorder %s97, %s99
      %p103 = scmp.eq.s32.totalorder %s21, 0
      %p104 = por %p102, %p103
      %p105 = scmp.ne.s32.totalorder %s97, %s99
      %p106 = scmp.eq.s32.totalorder %s26, 2
      %p107 = por %p105, %p106
      %p108 = scmp.ne.s32.totalorder %s99, %s100
      %p109 = scmp.eq.s32.totalorder %s26, 0
      %p110 = por %p108, %p109
      %p111 = scmp.ne.s32.totalorder %s99, %s100
      %p112 = scmp.eq.s32.totalorder %s27, 2
      %p113 = por %p111, %p112
      %p115 = scmp.ne.s32.totalorder %s100, %s114
      %p116 = scmp.eq.s32.totalorder %s27, 0
      %p117 = por %p115, %p116
      %s119 = sadd.s32 %s118, 1
      %p122 = scmp.eq.s32.totalorder %s21, 2
      %p123 = scmp.ne.s32.totalorder %s118, %s120
      %p124 = scmp.eq.s32.totalorder %s21, 0
      %p125 = por %p123, %p124
      %p126 = scmp.ne.s32.totalorder %s118, %s120
      %p127 = scmp.eq.s32.totalorder %s26, 2
      %p128 = por %p126, %p127
      %p129 = scmp.ne.s32.totalorder %s120, %s121
      %p130 = scmp.eq.s32.totalorder %s26, 0
      %p131 = por %p129, %p130
      %p132 = scmp.ne.s32.totalorder %s120, %s121
      %p133 = scmp.eq.s32.totalorder %s27, 2
      %p134 = por %p132, %p133
      %p136 = scmp.ne.s32.totalorder %s121, %s135
      %p137 = scmp.eq.s32.totalorder %s27, 0
      %p138 = por %p136, %p137
      %s140 = sadd.s32 %s139, 1
      %p143 = scmp.eq.s32.totalorder %s21, 2
      %p144 = scmp.ne.s32.totalorder %s139, %s141
      %p145 = scmp.eq.s32.totalorder %s21, 0
      %p146 = por %p144, %p145
      %p147 = scmp.ne.s32.totalorder %s139, %s141
      %p148 = scmp.eq.s32.totalorder %s26, 2
      %p149 = por %p147, %p148
      %p150 = scmp.ne.s32.totalorder %s141, %s142
      %p151 = scmp.eq.s32.totalorder %s26, 0
      %p152 = por %p150, %p151
      %p153 = scmp.ne.s32.totalorder %s141, %s142
      %p154 = scmp.eq.s32.totalorder %s27, 2
      %p155 = por %p153, %p154
      %p157 = scmp.ne.s32.totalorder %s142, %s156
      %p158 = scmp.eq.s32.totalorder %s27, 0
      %p159 = por %p157, %p158
      %s161 = sadd.s32 %s160, 1
      %p164 = scmp.eq.s32.totalorder %s21, 2
      %p165 = scmp.ne.s32.totalorder %s160, %s162
      %p166 = scmp.eq.s32.totalorder %s21, 0
      %p167 = por %p165, %p166
      %p168 = scmp.ne.s32.totalorder %s160, %s162
      %p169 = scmp.eq.s32.totalorder %s26, 2
      %p170 = por %p168, %p169
      %p171 = scmp.ne.s32.totalorder %s162, %s163
      %p172 = scmp.eq.s32.totalorder %s26, 0
      %p173 = por %p171, %p172
      %p174 = scmp.ne.s32.totalorder %s162, %s163
      %p175 = scmp.eq.s32.totalorder %s27, 2
      %p176 = por %p174, %p175
      %p178 = scmp.ne.s32.totalorder %s163, %s177
      %p179 = scmp.eq.s32.totalorder %s27, 0
      %p180 = por %p178, %p179
      %s182 = sadd.s32 %s181, 1
      %p185 = scmp.eq.s32.totalorder %s21, 2
      %p186 = scmp.ne.s32.totalorder %s181, %s183
      %p187 = scmp.eq.s32.totalorder %s21, 0
      %p188 = por %p186, %p187
      %p189 = scmp.ne.s32.totalorder %s181, %s183
      %p190 = scmp.eq.s32.totalorder %s26, 2
      %p191 = por %p189, %p190
      %p192 = scmp.ne.s32.totalorder %s183, %s184
      %p193 = scmp.eq.s32.totalorder %s26, 0
      %p194 = por %p192, %p193
      %p195 = scmp.ne.s32.totalorder %s183, %s184
      %p196 = scmp.eq.s32.totalorder %s27, 2
      %p197 = por %p195, %p196
      %p199 = scmp.ne.s32.totalorder %s184, %s198
      %p200 = scmp.eq.s32.totalorder %s27, 0
      %p201 = por %p199, %p200
      %s203 = sadd.s32 %s202, 1
      %p206 = scmp.eq.s32.totalorder %s21, 2
      %p207 = scmp.ne.s32.totalorder %s202, %s204
      %p208 = scmp.eq.s32.totalorder %s21, 0
      %p209 = por %p207, %p208
      %p210 = scmp.ne.s32.totalorder %s202, %s204
      %p211 = scmp.eq.s32.totalorder %s26, 2
      %p212 = por %p210, %p211
      %p213 = scmp.ne.s32.totalorder %s204, %s205
      %p214 = scmp.eq.s32.totalorder %s26, 0
      %p215 = por %p213, %p214
      %p216 = scmp.ne.s32.totalorder %s204, %s205
      %p217 = scmp.eq.s32.totalorder %s27, 2
      %p218 = por %p216, %p217
      %p220 = scmp.ne.s32.totalorder %s205, %s219
      %p221 = scmp.eq.s32.totalorder %s27, 0
      %p222 = por %p220, %p221
      %s224 = sadd.s32 %s223, 1
      %p227 = scmp.eq.s32.totalorder %s21, 2
      %p228 = scmp.ne.s32.totalorder %s223, %s225
      %p229 = scmp.eq.s32.totalorder %s21, 0
      %p230 = por %p228, %p229
      %p231 = scmp.ne.s32.totalorder %s223, %s225
      %p232 = scmp.eq.s32.totalorder %s26, 2
      %p233 = por %p231, %p232
      %p234 = scmp.ne.s32.totalorder %s225, %s226
      %p235 = scmp.eq.s32.totalorder %s26, 0
      %p236 = por %p234, %p235
      %p237 = scmp.ne.s32.totalorder %s225, %s226
      %p238 = scmp.eq.s32.totalorder %s27, 2
      %p239 = por %p237, %p238
      %p241 = scmp.ne.s32.totalorder %s226, %s240
      %p242 = scmp.eq.s32.totalorder %s27, 0
      %p243 = por %p241, %p242
      %s245 = sadd.s32 %s244, 1
      %p248 = scmp.eq.s32.totalorder %s21, 2
      %p249 = scmp.ne.s32.totalorder %s244, %s246
      %p250 = scmp.eq.s32.totalorder %s21, 0
      %p251 = por %p249, %p250
      %p252 = scmp.ne.s32.totalorder %s244, %s246
      %p253 = scmp.eq.s32.totalorder %s26, 2
      %p254 = por %p252, %p253
      %p255 = scmp.ne.s32.totalorder %s246, %s247
      %p256 = scmp.eq.s32.totalorder %s26, 0
      %p257 = por %p255, %p256
      %p258 = scmp.ne.s32.totalorder %s246, %s247
      %p259 = scmp.eq.s32.totalorder %s27, 2
      %p260 = por %p258, %p259
      %p262 = scmp.ne.s32.totalorder %s247, %s261
      %p263 = scmp.eq.s32.totalorder %s27, 0
      %p264 = por %p262, %p263
      %s266 = sadd.s32 %s265, 1
      %p269 = scmp.eq.s32.totalorder %s21, 2
      %p270 = scmp.ne.s32.totalorder %s265, %s267
      %p271 = scmp.eq.s32.totalorder %s21, 0
      %p272 = por %p270, %p271
      %p273 = scmp.ne.s32.totalorder %s265, %s267
      %p274 = scmp.eq.s32.totalorder %s26, 2
      %p275 = por %p273, %p274
      %p276 = scmp.ne.s32.totalorder %s267, %s268
      %p277 = scmp.eq.s32.totalorder %s26, 0
      %p278 = por %p276, %p277
      %p279 = scmp.ne.s32.totalorder %s267, %s268
      %p280 = scmp.eq.s32.totalorder %s27, 2
      %p281 = por %p279, %p280
      %p283 = scmp.ne.s32.totalorder %s268, %s282
      %p284 = scmp.eq.s32.totalorder %s27, 0
      %p285 = por %p283, %p284
      %p286 = scmp.le.s32.totalorder 1, %s21
      %p287 = scmp.lt.s32.totalorder %s21, 4
      %p288 = pnand %p286, %p287
      %p289 = pneg %p288
      // Predicated region
      $region9: #{snnmil_forward.1} parent=5 // pred_check
        _
      $region10: #{snnmil_forward.1} parent=5 // pred_check_branch
        %291 = sbr.rel (%p288) target = $region12
      $region11: #{snnmil_forward.1} parent=5 // pred_region
        %s292 = ssub.s32 %s21, 1
        // Predicated region
        $region13: #{snnmil_forward.1} parent=11 // pred_check
          %p293 = pneg %p68
        $region14: #{snnmil_forward.1} parent=11 // pred_check_branch
          %295 = sbr.rel (%p293) target = $region16
        $region15: #{snnmil_forward.1} parent=11 // pred_region
          _
        $region16: #{snnmil_forward.1} parent=11 // pred_fallthru
          _
        // Predicated region
        $region17: #{snnmil_forward.1} parent=11 // pred_check
          %p296 = pneg %p89
        $region18: #{snnmil_forward.1} parent=11 // pred_check_branch
          %298 = sbr.rel (%p296) target = $region20
        $region19: #{snnmil_forward.1} parent=11 // pred_region
          _
        $region20: #{snnmil_forward.1} parent=11 // pred_fallthru
          _
        // Predicated region
        $region21: #{snnmil_forward.1} parent=11 // pred_check
          %p299 = pneg %p110
        $region22: #{snnmil_forward.1} parent=11 // pred_check_branch
          %301 = sbr.rel (%p299) target = $region24
        $region23: #{snnmil_forward.1} parent=11 // pred_region
          _
        $region24: #{snnmil_forward.1} parent=11 // pred_fallthru
          _
        // Predicated region
        $region25: #{snnmil_forward.1} parent=11 // pred_check
          %p302 = pneg %p131
        $region26: #{snnmil_forward.1} parent=11 // pred_check_branch
          %304 = sbr.rel (%p302) target = $region28
        $region27: #{snnmil_forward.1} parent=11 // pred_region
          _
        $region28: #{snnmil_forward.1} parent=11 // pred_fallthru
          _
        // Predicated region
        $region29: #{snnmil_forward.1} parent=11 // pred_check
          %p305 = pneg %p152
        $region30: #{snnmil_forward.1} parent=11 // pred_check_branch
          %307 = sbr.rel (%p305) target = $region32
        $region31: #{snnmil_forward.1} parent=11 // pred_region
          _
        $region32: #{snnmil_forward.1} parent=11 // pred_fallthru
          _
        // Predicated region
        $region33: #{snnmil_forward.1} parent=11 // pred_check
          %p308 = pneg %p173
        $region34: #{snnmil_forward.1} parent=11 // pred_check_branch
          %310 = sbr.rel (%p308) target = $region36
        $region35: #{snnmil_forward.1} parent=11 // pred_region
          _
        $region36: #{snnmil_forward.1} parent=11 // pred_fallthru
          _
        // Predicated region
        $region37: #{snnmil_forward.1} parent=11 // pred_check
          %p311 = pneg %p194
        $region38: #{snnmil_forward.1} parent=11 // pred_check_branch
          %313 = sbr.rel (%p311) target = $region40
        $region39: #{snnmil_forward.1} parent=11 // pred_region
          _
        $region40: #{snnmil_forward.1} parent=11 // pred_fallthru
          _
      $region12: #{snnmil_forward.1} parent=5 // pred_fallthru
        _
      %p314 = scmp.lt.s32.totalorder %s21, 3
      // Predicated region
      $region41: #{snnmil_forward.1} parent=5 // pred_check
        %p315 = pneg %p314
      $region42: #{snnmil_forward.1} parent=5 // pred_check_branch
        %317 = sbr.rel (%p315) target = $region44
      $region43: #{snnmil_forward.1} parent=5 // pred_region
        // Predicated region
        $region45: #{snnmil_forward.1} parent=43 // pred_check
          %p318 = pneg %p41
        $region46: #{snnmil_forward.1} parent=43 // pred_check_branch
          %320 = sbr.rel (%p318) target = $region48
        $region47: #{snnmil_forward.1} parent=43 // pred_region
          %s321 = smul.u32 16, %s21
          %p322 = scmp.lt.s32.totalorder %s321, 47
          %s323 = scalar_select %p322, %s321, 47
          %s324 = smul.addr %s323, 4
          %s325 = smul.addr %s324, 4
          %s326 = scalar_lea.vmem %s0, %s325
          %s327 = smul.u32 16, %s21
        $region48: #{snnmil_forward.1} parent=43 // pred_fallthru
          _
      $region44: #{snnmil_forward.1} parent=5 // pred_fallthru
        _
      %p328 = scmp.le.s32.totalorder 1, %s21
      %p329 = scmp.lt.s32.totalorder %s21, 4
      %p330 = pnand %p328, %p329
      %p331 = pneg %p330
      // Predicated region
      $region49: #{snnmil_forward.1} parent=5 // pred_check
        _
      $region50: #{snnmil_forward.1} parent=5 // pred_check_branch
        %333 = sbr.rel (%p330) target = $region52
      $region51: #{snnmil_forward.1} parent=5 // pred_region
        %s334 = ssub.s32 %s21, 1
        %s335 = smul.u32 16, %s26
        %p336 = scmp.lt.s32.totalorder %s335, 47
        %s337 = scalar_select %p336, %s335, 47
        %s338 = smul.addr %s337, 4
        %s339 = smul.addr %s338, 4
        %s340 = scalar_lea.vmem %s0, %s339
        %p341 = pneg %p47
        %p342 = pneg %p44
        %p343 = pneg %p68
        %p344 = pneg %p65
        %p345 = pneg %p89
        %p346 = pneg %p86
        %p347 = pneg %p110
        %p348 = pneg %p107
        %p349 = pneg %p131
        %p350 = pneg %p128
        %p351 = pneg %p152
        %p352 = pneg %p149
        %p353 = pneg %p173
        %p354 = pneg %p170
        %p355 = pneg %p194
        %p356 = pneg %p191
        %p357 = pneg %p215
        %p358 = pneg %p212
        %p359 = pneg %p236
        %p360 = pneg %p233
        %p361 = pneg %p257
        %p362 = pneg %p254
        %p363 = pneg %p278
        %p364 = pneg %p275
        %s365 = smul.u32 16, %s26
        %p366 = scmp.lt.s32.totalorder %s365, 47
        %s367 = scalar_select %p366, %s365, 47
        %s368 = smul.addr %s367, 4
        %s369 = smul.addr %s368, 4
        %s370 = scalar_lea.vmem %s0, %s369
        %s371 = smul.u32 16, %s26
        %p372 = scmp.eq.s32.totalorder %s26, 0
        // Predicated region
        $region53: #{snnmil_forward.1} parent=51 // pred_check
          %p373 = pneg %p372
        $region54: #{snnmil_forward.1} parent=51 // pred_check_branch
          %375 = sbr.rel (%p373) target = $region56
        $region55: #{snnmil_forward.1} parent=51 // pred_region
          %vm376 = vcmask 0
          %377 = vst.msk [vmem:[#allocation2] sm:$0x1] %vm376, -1e+30
          %378 = vst.msk [vmem:[#allocation3] sm:$0x1] %vm376, 0.0
          %v379 = vlaneseq
          %vm380 = vcmp.ge.s32.totalorder %v379, 0
          %vm381 = vcmp.lt.s32.totalorder %v379, 256
          %vm382 = vmand %vm380, %vm381
          %383 = vst.msk [vmem:[#allocation4] sm:$0x3] %vm382, 0.0
        $region56: #{snnmil_forward.1} parent=51 // pred_fallthru
          _
        %v384 = vld [vmem:[%s370] sm:$0xff]
        %v385 = vld [vmem:[%s370 + $0x8] sm:$0xff]
        %v386 = vld [vmem:[%s370 + $0x10] sm:$0xff]
        %v387 = vld [vmem:[%s370 + $0x18] sm:$0xff]
        %v388 = vld [vmem:[%s370 + $0x20] sm:$0xff]
        %v389 = vld [vmem:[%s370 + $0x28] sm:$0xff]
        %v390 = vld [vmem:[%s370 + $0x30] sm:$0xff]
        %v391 = vld [vmem:[%s370 + $0x38] sm:$0xff]
        %v392 = vld [vmem:[%s370 + $0x40] sm:$0xff]
        %v393 = vld [vmem:[%s370 + $0x48] sm:$0xff]
        %v394 = vld [vmem:[%s370 + $0x50] sm:$0xff]
        %v395 = vld [vmem:[%s370 + $0x58] sm:$0xff]
        %v396 = vld [vmem:[%s370 + $0x60] sm:$0xff]
        %v397 = vld [vmem:[%s370 + $0x68] sm:$0xff]
        %v398 = vld [vmem:[%s370 + $0x70] sm:$0xff]
        %v399 = vld [vmem:[%s370 + $0x78] sm:$0xff]
        %v400 = vld [vmem:[%s370 + $0x80] sm:$0xff]
        %v401 = vld [vmem:[%s370 + $0x88] sm:$0xff]
        %v402 = vld [vmem:[%s370 + $0x90] sm:$0xff]
        %v403 = vld [vmem:[%s370 + $0x98] sm:$0xff]
        %v404 = vld [vmem:[%s370 + $0xa0] sm:$0xff]
        %v405 = vld [vmem:[%s370 + $0xa8] sm:$0xff]
        %v406 = vld [vmem:[%s370 + $0xb0] sm:$0xff]
        %v407 = vld [vmem:[%s370 + $0xb8] sm:$0xff]
        %v408 = vld [vmem:[%s370 + $0xc0] sm:$0xff]
        %v409 = vld [vmem:[%s370 + $0xc8] sm:$0xff]
        %v410 = vld [vmem:[%s370 + $0xd0] sm:$0xff]
        %v411 = vld [vmem:[%s370 + $0xd8] sm:$0xff]
        %v412 = vld [vmem:[%s370 + $0xe0] sm:$0xff]
        %v413 = vld [vmem:[%s370 + $0xe8] sm:$0xff]
        %v414 = vld [vmem:[%s370 + $0xf0] sm:$0xff]
        %v415 = vld [vmem:[%s370 + $0xf8] sm:$0xff]
        %v416 = vld [vmem:[%s1] sm:$0xff]
        %v417 = vld [vmem:[%s1 + $0x8] sm:$0xff]
        %v418 = vld [vmem:[%s1 + $0x10] sm:$0xff]
        %v419 = vld [vmem:[%s1 + $0x18] sm:$0xff]
        %v420 = vld [vmem:[%s1 + $0x20] sm:$0xff]
        %v421 = vld [vmem:[%s1 + $0x28] sm:$0xff]
        %v422 = vld [vmem:[%s1 + $0x30] sm:$0xff]
        %v423 = vld [vmem:[%s1 + $0x38] sm:$0xff]
        %v424 = vld [vmem:[%s1 + $0x40] sm:$0xff]
        %v425 = vld [vmem:[%s1 + $0x48] sm:$0xff]
        %v426 = vld [vmem:[%s1 + $0x50] sm:$0xff]
        %v427 = vld [vmem:[%s1 + $0x58] sm:$0xff]
        %v428 = vld [vmem:[%s1 + $0x60] sm:$0xff]
        %v429 = vld [vmem:[%s1 + $0x68] sm:$0xff]
        %v430 = vld [vmem:[%s1 + $0x70] sm:$0xff]
        %v431 = vld [vmem:[%s1 + $0x78] sm:$0xff]
        %v432 = vld [vmem:[%s1 + $0x80] sm:$0xff]
        %v433 = vld [vmem:[%s1 + $0x88] sm:$0xff]
        %v434 = vld [vmem:[%s1 + $0x90] sm:$0xff]
        %v435 = vld [vmem:[%s1 + $0x98] sm:$0xff]
        %v436 = vld [vmem:[%s1 + $0xa0] sm:$0xff]
        %v437 = vld [vmem:[%s1 + $0xa8] sm:$0xff]
        %v438 = vld [vmem:[%s1 + $0xb0] sm:$0xff]
        %v439 = vld [vmem:[%s1 + $0xb8] sm:$0xff]
        %v440 = vld [vmem:[%s1 + $0xc0] sm:$0xff]
        %v441 = vld [vmem:[%s1 + $0xc8] sm:$0xff]
        %v442 = vld [vmem:[%s1 + $0xd0] sm:$0xff]
        %v443 = vld [vmem:[%s1 + $0xd8] sm:$0xff]
        %v444 = vld [vmem:[%s1 + $0xe0] sm:$0xff]
        %v445 = vld [vmem:[%s1 + $0xe8] sm:$0xff]
        %v446 = vld [vmem:[%s1 + $0xf0] sm:$0xff]
        %v447 = vld [vmem:[%s1 + $0xf8] sm:$0xff]
        %v448 = vld [vmem:[%s1 + $0x100] sm:$0xff]
        %v449 = vld [vmem:[%s1 + $0x108] sm:$0xff]
        %v450 = vld [vmem:[%s1 + $0x110] sm:$0xff]
        %v451 = vld [vmem:[%s1 + $0x118] sm:$0xff]
        %v452 = vld [vmem:[%s1 + $0x120] sm:$0xff]
        %v453 = vld [vmem:[%s1 + $0x128] sm:$0xff]
        %v454 = vld [vmem:[%s1 + $0x130] sm:$0xff]
        %v455 = vld [vmem:[%s1 + $0x138] sm:$0xff]
        %v456 = vld [vmem:[%s1 + $0x140] sm:$0xff]
        %v457 = vld [vmem:[%s1 + $0x148] sm:$0xff]
        %v458 = vld [vmem:[%s1 + $0x150] sm:$0xff]
        %v459 = vld [vmem:[%s1 + $0x158] sm:$0xff]
        %v460 = vld [vmem:[%s1 + $0x160] sm:$0xff]
        %v461 = vld [vmem:[%s1 + $0x168] sm:$0xff]
        %v462 = vld [vmem:[%s1 + $0x170] sm:$0xff]
        %v463 = vld [vmem:[%s1 + $0x178] sm:$0xff]
        %v464 = vld [vmem:[%s1 + $0x180] sm:$0xff]
        %v465 = vld [vmem:[%s1 + $0x188] sm:$0xff]
        %v466 = vld [vmem:[%s1 + $0x190] sm:$0xff]
        %v467 = vld [vmem:[%s1 + $0x198] sm:$0xff]
        %v468 = vld [vmem:[%s1 + $0x1a0] sm:$0xff]
        %v469 = vld [vmem:[%s1 + $0x1a8] sm:$0xff]
        %v470 = vld [vmem:[%s1 + $0x1b0] sm:$0xff]
        %v471 = vld [vmem:[%s1 + $0x1b8] sm:$0xff]
        %v472 = vld [vmem:[%s1 + $0x1c0] sm:$0xff]
        %v473 = vld [vmem:[%s1 + $0x1c8] sm:$0xff]
        %v474 = vld [vmem:[%s1 + $0x1d0] sm:$0xff]
        %v475 = vld [vmem:[%s1 + $0x1d8] sm:$0xff]
        %v476 = vld [vmem:[%s1 + $0x1e0] sm:$0xff]
        %v477 = vld [vmem:[%s1 + $0x1e8] sm:$0xff]
        %v478 = vld [vmem:[%s1 + $0x1f0] sm:$0xff]
        %v479 = vld [vmem:[%s1 + $0x1f8] sm:$0xff]
        %v480 = vld [vmem:[%s2] sm:$0x3]
        %v482 = vlaneseq
        %v483 = vshrl.u32 %v482, 7
        %v484 = vsub.s32 0, %v483
        %v485 = vrot.slane %v480, %v484
        %v486 = vlaneseq
        %v487 = vshrl.u32 %v486, 7
        %v488 = vsub.s32 1, %v487
        %v489 = vrot.slane %v480, %v488
        %v524 = vunpack.c.l.b16 %v384
        %v525 = vunpack.c.h.b16 %v384
        %v526 = vunpack.c.l.b16 %v385
        %v527 = vunpack.c.h.b16 %v385
        %v528 = vunpack.c.l.b16 %v386
        %v529 = vunpack.c.h.b16 %v386
        %v530 = vunpack.c.l.b16 %v387
        %v531 = vunpack.c.h.b16 %v387
        %v532 = vunpack.c.l.b16 %v388
        %v533 = vunpack.c.h.b16 %v388
        %v534 = vunpack.c.l.b16 %v389
        %v535 = vunpack.c.h.b16 %v389
        %v536 = vunpack.c.l.b16 %v390
        %v537 = vunpack.c.h.b16 %v390
        %v538 = vunpack.c.l.b16 %v391
        %v539 = vunpack.c.h.b16 %v391
        %v540 = vunpack.c.l.b16 %v392
        %v541 = vunpack.c.h.b16 %v392
        %v542 = vunpack.c.l.b16 %v393
        %v543 = vunpack.c.h.b16 %v393
        %v544 = vunpack.c.l.b16 %v394
        %v545 = vunpack.c.h.b16 %v394
        %v546 = vunpack.c.l.b16 %v395
        %v547 = vunpack.c.h.b16 %v395
        %v548 = vunpack.c.l.b16 %v396
        %v549 = vunpack.c.h.b16 %v396
        %v550 = vunpack.c.l.b16 %v397
        %v551 = vunpack.c.h.b16 %v397
        %v552 = vunpack.c.l.b16 %v398
        %v553 = vunpack.c.h.b16 %v398
        %v554 = vunpack.c.l.b16 %v399
        %v555 = vunpack.c.h.b16 %v399
        %v556 = vunpack.c.l.b16 %v400
        %v557 = vunpack.c.h.b16 %v400
        %v558 = vunpack.c.l.b16 %v401
        %v559 = vunpack.c.h.b16 %v401
        %v560 = vunpack.c.l.b16 %v402
        %v561 = vunpack.c.h.b16 %v402
        %v562 = vunpack.c.l.b16 %v403
        %v563 = vunpack.c.h.b16 %v403
        %v564 = vunpack.c.l.b16 %v404
        %v565 = vunpack.c.h.b16 %v404
        %v566 = vunpack.c.l.b16 %v405
        %v567 = vunpack.c.h.b16 %v405
        %v568 = vunpack.c.l.b16 %v406
        %v569 = vunpack.c.h.b16 %v406
        %v570 = vunpack.c.l.b16 %v407
        %v571 = vunpack.c.h.b16 %v407
        %v572 = vunpack.c.l.b16 %v408
        %v573 = vunpack.c.h.b16 %v408
        %v574 = vunpack.c.l.b16 %v409
        %v575 = vunpack.c.h.b16 %v409
        %v576 = vunpack.c.l.b16 %v410
        %v577 = vunpack.c.h.b16 %v410
        %v578 = vunpack.c.l.b16 %v411
        %v579 = vunpack.c.h.b16 %v411
        %v580 = vunpack.c.l.b16 %v412
        %v581 = vunpack.c.h.b16 %v412
        %v582 = vunpack.c.l.b16 %v413
        %v583 = vunpack.c.h.b16 %v413
        %v584 = vunpack.c.l.b16 %v414
        %v585 = vunpack.c.h.b16 %v414
        %v586 = vunpack.c.l.b16 %v415
        %v587 = vunpack.c.h.b16 %v415
        %v588 = vpack.c.b16 %v528, %v524
        %v589 = vpack.c.b16 %v529, %v525
        %v590 = vpack.c.b16 %v530, %v526
        %v591 = vpack.c.b16 %v531, %v527
        %v592 = vpack.c.b16 %v536, %v532
        %v593 = vpack.c.b16 %v537, %v533
        %v594 = vpack.c.b16 %v538, %v534
        %v595 = vpack.c.b16 %v539, %v535
        %v596 = vpack.c.b16 %v544, %v540
        %v597 = vpack.c.b16 %v545, %v541
        %v598 = vpack.c.b16 %v546, %v542
        %v599 = vpack.c.b16 %v547, %v543
        %v600 = vpack.c.b16 %v552, %v548
        %v601 = vpack.c.b16 %v553, %v549
        %v602 = vpack.c.b16 %v554, %v550
        %v603 = vpack.c.b16 %v555, %v551
        %v604 = vpack.c.b16 %v560, %v556
        %v605 = vpack.c.b16 %v561, %v557
        %v606 = vpack.c.b16 %v562, %v558
        %v607 = vpack.c.b16 %v563, %v559
        %v608 = vpack.c.b16 %v568, %v564
        %v609 = vpack.c.b16 %v569, %v565
        %v610 = vpack.c.b16 %v570, %v566
        %v611 = vpack.c.b16 %v571, %v567
        %v612 = vpack.c.b16 %v576, %v572
        %v613 = vpack.c.b16 %v577, %v573
        %v614 = vpack.c.b16 %v578, %v574
        %v615 = vpack.c.b16 %v579, %v575
        %v616 = vpack.c.b16 %v584, %v580
        %v617 = vpack.c.b16 %v585, %v581
        %v618 = vpack.c.b16 %v586, %v582
        %v619 = vpack.c.b16 %v587, %v583
        %v716 = vunpack.c.l.b16 %v416
        %v717 = vunpack.c.h.b16 %v416
        %v718 = vunpack.c.l.b16 %v417
        %v719 = vunpack.c.h.b16 %v417
        %v720 = vunpack.c.l.b16 %v418
        %v721 = vunpack.c.h.b16 %v418
        %v722 = vunpack.c.l.b16 %v419
        %v723 = vunpack.c.h.b16 %v419
        %v724 = vunpack.c.l.b16 %v420
        %v725 = vunpack.c.h.b16 %v420
        %v726 = vunpack.c.l.b16 %v421
        %v727 = vunpack.c.h.b16 %v421
        %v728 = vunpack.c.l.b16 %v422
        %v729 = vunpack.c.h.b16 %v422
        %v730 = vunpack.c.l.b16 %v423
        %v731 = vunpack.c.h.b16 %v423
        %v732 = vunpack.c.l.b16 %v424
        %v733 = vunpack.c.h.b16 %v424
        %v734 = vunpack.c.l.b16 %v425
        %v735 = vunpack.c.h.b16 %v425
        %v736 = vunpack.c.l.b16 %v426
        %v737 = vunpack.c.h.b16 %v426
        %v738 = vunpack.c.l.b16 %v427
        %v739 = vunpack.c.h.b16 %v427
        %v740 = vunpack.c.l.b16 %v428
        %v741 = vunpack.c.h.b16 %v428
        %v742 = vunpack.c.l.b16 %v429
        %v743 = vunpack.c.h.b16 %v429
        %v744 = vunpack.c.l.b16 %v430
        %v745 = vunpack.c.h.b16 %v430
        %v746 = vunpack.c.l.b16 %v431
        %v747 = vunpack.c.h.b16 %v431
        %v748 = vunpack.c.l.b16 %v432
        %v749 = vunpack.c.h.b16 %v432
        %v750 = vunpack.c.l.b16 %v433
        %v751 = vunpack.c.h.b16 %v433
        %v752 = vunpack.c.l.b16 %v434
        %v753 = vunpack.c.h.b16 %v434
        %v754 = vunpack.c.l.b16 %v435
        %v755 = vunpack.c.h.b16 %v435
        %v756 = vunpack.c.l.b16 %v436
        %v757 = vunpack.c.h.b16 %v436
        %v758 = vunpack.c.l.b16 %v437
        %v759 = vunpack.c.h.b16 %v437
        %v760 = vunpack.c.l.b16 %v438
        %v761 = vunpack.c.h.b16 %v438
        %v762 = vunpack.c.l.b16 %v439
        %v763 = vunpack.c.h.b16 %v439
        %v764 = vunpack.c.l.b16 %v440
        %v765 = vunpack.c.h.b16 %v440
        %v766 = vunpack.c.l.b16 %v441
        %v767 = vunpack.c.h.b16 %v441
        %v768 = vunpack.c.l.b16 %v442
        %v769 = vunpack.c.h.b16 %v442
        %v770 = vunpack.c.l.b16 %v443
        %v771 = vunpack.c.h.b16 %v443
        %v772 = vunpack.c.l.b16 %v444
        %v773 = vunpack.c.h.b16 %v444
        %v774 = vunpack.c.l.b16 %v445
        %v775 = vunpack.c.h.b16 %v445
        %v776 = vunpack.c.l.b16 %v446
        %v777 = vunpack.c.h.b16 %v446
        %v778 = vunpack.c.l.b16 %v447
        %v779 = vunpack.c.h.b16 %v447
        %v780 = vunpack.c.l.b16 %v448
        %v781 = vunpack.c.h.b16 %v448
        %v782 = vunpack.c.l.b16 %v449
        %v783 = vunpack.c.h.b16 %v449
        %v784 = vunpack.c.l.b16 %v450
        %v785 = vunpack.c.h.b16 %v450
        %v786 = vunpack.c.l.b16 %v451
        %v787 = vunpack.c.h.b16 %v451
        %v788 = vunpack.c.l.b16 %v452
        %v789 = vunpack.c.h.b16 %v452
        %v790 = vunpack.c.l.b16 %v453
        %v791 = vunpack.c.h.b16 %v453
        %v792 = vunpack.c.l.b16 %v454
        %v793 = vunpack.c.h.b16 %v454
        %v794 = vunpack.c.l.b16 %v455
        %v795 = vunpack.c.h.b16 %v455
        %v796 = vunpack.c.l.b16 %v456
        %v797 = vunpack.c.h.b16 %v456
        %v798 = vunpack.c.l.b16 %v457
        %v799 = vunpack.c.h.b16 %v457
        %v800 = vunpack.c.l.b16 %v458
        %v801 = vunpack.c.h.b16 %v458
        %v802 = vunpack.c.l.b16 %v459
        %v803 = vunpack.c.h.b16 %v459
        %v804 = vunpack.c.l.b16 %v460
        %v805 = vunpack.c.h.b16 %v460
        %v806 = vunpack.c.l.b16 %v461
        %v807 = vunpack.c.h.b16 %v461
        %v808 = vunpack.c.l.b16 %v462
        %v809 = vunpack.c.h.b16 %v462
        %v810 = vunpack.c.l.b16 %v463
        %v811 = vunpack.c.h.b16 %v463
        %v812 = vunpack.c.l.b16 %v464
        %v813 = vunpack.c.h.b16 %v464
        %v814 = vunpack.c.l.b16 %v465
        %v815 = vunpack.c.h.b16 %v465
        %v816 = vunpack.c.l.b16 %v466
        %v817 = vunpack.c.h.b16 %v466
        %v818 = vunpack.c.l.b16 %v467
        %v819 = vunpack.c.h.b16 %v467
        %v820 = vunpack.c.l.b16 %v468
        %v821 = vunpack.c.h.b16 %v468
        %v822 = vunpack.c.l.b16 %v469
        %v823 = vunpack.c.h.b16 %v469
        %v824 = vunpack.c.l.b16 %v470
        %v825 = vunpack.c.h.b16 %v470
        %v826 = vunpack.c.l.b16 %v471
        %v827 = vunpack.c.h.b16 %v471
        %v828 = vunpack.c.l.b16 %v472
        %v829 = vunpack.c.h.b16 %v472
        %v830 = vunpack.c.l.b16 %v473
        %v831 = vunpack.c.h.b16 %v473
        %v832 = vunpack.c.l.b16 %v474
        %v833 = vunpack.c.h.b16 %v474
        %v834 = vunpack.c.l.b16 %v475
        %v835 = vunpack.c.h.b16 %v475
        %v836 = vunpack.c.l.b16 %v476
        %v837 = vunpack.c.h.b16 %v476
        %v838 = vunpack.c.l.b16 %v477
        %v839 = vunpack.c.h.b16 %v477
        %v840 = vunpack.c.l.b16 %v478
        %v841 = vunpack.c.h.b16 %v478
        %v842 = vunpack.c.l.b16 %v479
        %v843 = vunpack.c.h.b16 %v479
        %v844 = vpack.c.b16 %v718, %v716
        %v845 = vpack.c.b16 %v719, %v717
        %v846 = vpack.c.b16 %v722, %v720
        %v847 = vpack.c.b16 %v723, %v721
        %v848 = vpack.c.b16 %v726, %v724
        %v849 = vpack.c.b16 %v727, %v725
        %v850 = vpack.c.b16 %v730, %v728
        %v851 = vpack.c.b16 %v731, %v729
        %v852 = vpack.c.b16 %v734, %v732
        %v853 = vpack.c.b16 %v735, %v733
        %v854 = vpack.c.b16 %v738, %v736
        %v855 = vpack.c.b16 %v739, %v737
        %v856 = vpack.c.b16 %v742, %v740
        %v857 = vpack.c.b16 %v743, %v741
        %v858 = vpack.c.b16 %v746, %v744
        %v859 = vpack.c.b16 %v747, %v745
        %v860 = vpack.c.b16 %v750, %v748
        %v861 = vpack.c.b16 %v751, %v749
        %v862 = vpack.c.b16 %v754, %v752
        %v863 = vpack.c.b16 %v755, %v753
        %v864 = vpack.c.b16 %v758, %v756
        %v865 = vpack.c.b16 %v759, %v757
        %v866 = vpack.c.b16 %v762, %v760
        %v867 = vpack.c.b16 %v763, %v761
        %v868 = vpack.c.b16 %v766, %v764
        %v869 = vpack.c.b16 %v767, %v765
        %v870 = vpack.c.b16 %v770, %v768
        %v871 = vpack.c.b16 %v771, %v769
        %v872 = vpack.c.b16 %v774, %v772
        %v873 = vpack.c.b16 %v775, %v773
        %v874 = vpack.c.b16 %v778, %v776
        %v875 = vpack.c.b16 %v779, %v777
        %v876 = vpack.c.b16 %v782, %v780
        %v877 = vpack.c.b16 %v783, %v781
        %v878 = vpack.c.b16 %v786, %v784
        %v879 = vpack.c.b16 %v787, %v785
        %v880 = vpack.c.b16 %v790, %v788
        %v881 = vpack.c.b16 %v791, %v789
        %v882 = vpack.c.b16 %v794, %v792
        %v883 = vpack.c.b16 %v795, %v793
        %v884 = vpack.c.b16 %v798, %v796
        %v885 = vpack.c.b16 %v799, %v797
        %v886 = vpack.c.b16 %v802, %v800
        %v887 = vpack.c.b16 %v803, %v801
        %v888 = vpack.c.b16 %v806, %v804
        %v889 = vpack.c.b16 %v807, %v805
        %v890 = vpack.c.b16 %v810, %v808
        %v891 = vpack.c.b16 %v811, %v809
        %v892 = vpack.c.b16 %v814, %v812
        %v893 = vpack.c.b16 %v815, %v813
        %v894 = vpack.c.b16 %v818, %v816
        %v895 = vpack.c.b16 %v819, %v817
        %v896 = vpack.c.b16 %v822, %v820
        %v897 = vpack.c.b16 %v823, %v821
        %v898 = vpack.c.b16 %v826, %v824
        %v899 = vpack.c.b16 %v827, %v825
        %v900 = vpack.c.b16 %v830, %v828
        %v901 = vpack.c.b16 %v831, %v829
        %v902 = vpack.c.b16 %v834, %v832
        %v903 = vpack.c.b16 %v835, %v833
        %v904 = vpack.c.b16 %v838, %v836
        %v905 = vpack.c.b16 %v839, %v837
        %v906 = vpack.c.b16 %v842, %v840
        %v907 = vpack.c.b16 %v843, %v841
        %972 = vmatprep.subr.bf16.mxu0 %v845
        %973 = vmatpush1.bf16.msra.mxu0 %v844
        %974 = vmatprep.subr.bf16.mxu0 %v847
        %975 = vmatpush1.bf16.msra.mxu0 %v846
        %976 = vmatprep.subr.bf16.mxu0 %v849
        %977 = vmatpush1.bf16.msra.mxu0 %v848
        %978 = vmatprep.subr.bf16.mxu0 %v851
        %979 = vmatpush1.bf16.msra.mxu0 %v850
        %980 = vmatprep.subr.bf16.mxu0 %v853
        %981 = vmatpush1.bf16.msra.mxu0 %v852
        %982 = vmatprep.subr.bf16.mxu0 %v855
        %983 = vmatpush1.bf16.msra.mxu0 %v854
        %984 = vmatprep.subr.bf16.mxu0 %v857
        %985 = vmatpush1.bf16.msra.mxu0 %v856
        %986 = vmatprep.subr.bf16.mxu0 %v859
        %987 = vmatpush1.bf16.msra.mxu0 %v858
        %988 = vmatprep.subr.bf16.mxu0 %v861
        %989 = vmatpush1.bf16.msra.mxu0 %v860
        %990 = vmatprep.subr.bf16.mxu0 %v863
        %991 = vmatpush1.bf16.msra.mxu0 %v862
        %992 = vmatprep.subr.bf16.mxu0 %v865
        %993 = vmatpush1.bf16.msra.mxu0 %v864
        %994 = vmatprep.subr.bf16.mxu0 %v867
        %995 = vmatpush1.bf16.msra.mxu0 %v866
        %996 = vmatprep.subr.bf16.mxu0 %v869
        %997 = vmatpush1.bf16.msra.mxu0 %v868
        %998 = vmatprep.subr.bf16.mxu0 %v871
        %999 = vmatpush1.bf16.msra.mxu0 %v870
        %1000 = vmatprep.subr.bf16.mxu0 %v873
        %1001 = vmatpush1.bf16.msra.mxu0 %v872
        %1002 = vmatprep.subr.bf16.mxu0 %v875
        %1003 = vmatpush1.bf16.msra.mxu0 %v874
        %1004 = vmatprep.mubr.bf16.mxu0 %v589
        %1005 = vmatmul.mubr.bf16.gmra.mrb[0].mxu0 %v588
        %v1006 = vpop.f32.mrb[0].mxu0
        %v1007 = vadd.f32 %v485, %v1006
        %v1008 = vpop.f32.mrb[0].mxu0
        %v1009 = vadd.f32 %v489, %v1008
        %v1010 = vpop.f32.mrb[0].mxu0
        %v1011 = vadd.f32 %v485, %v1010
        %v1012 = vpop.f32.mrb[0].mxu0
        %v1013 = vadd.f32 %v489, %v1012
        %1014 = vmatprep.mubr.bf16.mxu0 %v593
        %1015 = vmatmul.mubr.bf16.gmra.mrb[0].mxu0 %v592
        %v1016 = vpop.f32.mrb[0].mxu0
        %v1017 = vadd.f32 %v485, %v1016
        %v1018 = vpop.f32.mrb[0].mxu0
        %v1019 = vadd.f32 %v489, %v1018
        %v1020 = vpop.f32.mrb[0].mxu0
        %v1021 = vadd.f32 %v485, %v1020
        %v1022 = vpop.f32.mrb[0].mxu0
        %v1023 = vadd.f32 %v489, %v1022
        %1024 = vmatprep.mubr.bf16.mxu0 %v597
        %1025 = vmatmul.mubr.bf16.gmra.mrb[0].mxu0 %v596
        %v1026 = vpop.f32.mrb[0].mxu0
        %v1027 = vadd.f32 %v485, %v1026
        %v1028 = vpop.f32.mrb[0].mxu0
        %v1029 = vadd.f32 %v489, %v1028
        %v1030 = vpop.f32.mrb[0].mxu0
        %v1031 = vadd.f32 %v485, %v1030
        %v1032 = vpop.f32.mrb[0].mxu0
        %v1033 = vadd.f32 %v489, %v1032
        %1034 = vmatprep.mubr.bf16.mxu0 %v601
        %1035 = vmatmul.mubr.bf16.gmra.mrb[0].mxu0 %v600
        %v1036 = vpop.f32.mrb[0].mxu0
        %v1037 = vadd.f32 %v485, %v1036
        %v1038 = vpop.f32.mrb[0].mxu0
        %v1039 = vadd.f32 %v489, %v1038
        %v1040 = vpop.f32.mrb[0].mxu0
        %v1041 = vadd.f32 %v485, %v1040
        %v1042 = vpop.f32.mrb[0].mxu0
        %v1043 = vadd.f32 %v489, %v1042
        %1044 = vmatprep.mubr.bf16.mxu0 %v605
        %1045 = vmatmul.mubr.bf16.gmra.mrb[0].mxu0 %v604
        %v1046 = vpop.f32.mrb[0].mxu0
        %v1047 = vadd.f32 %v485, %v1046
        %v1048 = vpop.f32.mrb[0].mxu0
        %v1049 = vadd.f32 %v489, %v1048
        %v1050 = vpop.f32.mrb[0].mxu0
        %v1051 = vadd.f32 %v485, %v1050
        %v1052 = vpop.f32.mrb[0].mxu0
        %v1053 = vadd.f32 %v489, %v1052
        %1054 = vmatprep.mubr.bf16.mxu0 %v609
        %1055 = vmatmul.mubr.bf16.gmra.mrb[0].mxu0 %v608
        %v1056 = vpop.f32.mrb[0].mxu0
        %v1057 = vadd.f32 %v485, %v1056
        %v1058 = vpop.f32.mrb[0].mxu0
        %v1059 = vadd.f32 %v489, %v1058
        %v1060 = vpop.f32.mrb[0].mxu0
        %v1061 = vadd.f32 %v485, %v1060
        %v1062 = vpop.f32.mrb[0].mxu0
        %v1063 = vadd.f32 %v489, %v1062
        %1064 = vmatprep.mubr.bf16.mxu0 %v613
        %1065 = vmatmul.mubr.bf16.gmra.mrb[0].mxu0 %v612
        %v1066 = vpop.f32.mrb[0].mxu0
        %v1067 = vadd.f32 %v485, %v1066
        %v1068 = vpop.f32.mrb[0].mxu0
        %v1069 = vadd.f32 %v489, %v1068
        %v1070 = vpop.f32.mrb[0].mxu0
        %v1071 = vadd.f32 %v485, %v1070
        %v1072 = vpop.f32.mrb[0].mxu0
        %v1073 = vadd.f32 %v489, %v1072
        %1074 = vmatprep.mubr.bf16.mxu0 %v617
        %1075 = vmatmul.mubr.bf16.gmra.mrb[0].mxu0 %v616
        %v1076 = vpop.f32.mrb[0].mxu0
        %v1077 = vadd.f32 %v485, %v1076
        %v1078 = vpop.f32.mrb[0].mxu0
        %v1079 = vadd.f32 %v489, %v1078
        %v1080 = vpop.f32.mrb[0].mxu0
        %v1081 = vadd.f32 %v485, %v1080
        %v1082 = vpop.f32.mrb[0].mxu0
        %v1083 = vadd.f32 %v489, %v1082
        %1084 = vdwg.mxu0
        %1085 = vmatprep.subr.bf16.mxu0 %v877
        %1086 = vmatpush1.bf16.msra.mxu0 %v876
        %1087 = vmatprep.subr.bf16.mxu0 %v879
        %1088 = vmatpush1.bf16.msra.mxu0 %v878
        %1089 = vmatprep.subr.bf16.mxu0 %v881
        %1090 = vmatpush1.bf16.msra.mxu0 %v880
        %1091 = vmatprep.subr.bf16.mxu0 %v883
        %1092 = vmatpush1.bf16.msra.mxu0 %v882
        %1093 = vmatprep.subr.bf16.mxu0 %v885
        %1094 = vmatpush1.bf16.msra.mxu0 %v884
        %1095 = vmatprep.subr.bf16.mxu0 %v887
        %1096 = vmatpush1.bf16.msra.mxu0 %v886
        %1097 = vmatprep.subr.bf16.mxu0 %v889
        %1098 = vmatpush1.bf16.msra.mxu0 %v888
        %1099 = vmatprep.subr.bf16.mxu0 %v891
        %1100 = vmatpush1.bf16.msra.mxu0 %v890
        %1101 = vmatprep.subr.bf16.mxu0 %v893
        %1102 = vmatpush1.bf16.msra.mxu0 %v892
        %1103 = vmatprep.subr.bf16.mxu0 %v895
        %1104 = vmatpush1.bf16.msra.mxu0 %v894
        %1105 = vmatprep.subr.bf16.mxu0 %v897
        %1106 = vmatpush1.bf16.msra.mxu0 %v896
        %1107 = vmatprep.subr.bf16.mxu0 %v899
        %1108 = vmatpush1.bf16.msra.mxu0 %v898
        %1109 = vmatprep.subr.bf16.mxu0 %v901
        %1110 = vmatpush1.bf16.msra.mxu0 %v900
        %1111 = vmatprep.subr.bf16.mxu0 %v903
        %1112 = vmatpush1.bf16.msra.mxu0 %v902
        %1113 = vmatprep.subr.bf16.mxu0 %v905
        %1114 = vmatpush1.bf16.msra.mxu0 %v904
        %1115 = vmatprep.subr.bf16.mxu0 %v907
        %1116 = vmatpush1.bf16.msra.mxu0 %v906
        %1117 = vmatprep.mubr.bf16.mxu0 %v591
        %1118 = vmatmul.mubr.bf16.gmra.mrb[0].mxu0 %v590
        %v1119 = vpop.f32.mrb[0].mxu0
        %v1120 = vadd.f32 %v1007, %v1119
        %v1121 = vpop.f32.mrb[0].mxu0
        %v1122 = vadd.f32 %v1009, %v1121
        %v1123 = vpop.f32.mrb[0].mxu0
        %v1124 = vadd.f32 %v1011, %v1123
        %v1125 = vpop.f32.mrb[0].mxu0
        %v1126 = vadd.f32 %v1013, %v1125
        %1127 = vmatprep.mubr.bf16.mxu0 %v595
        %1128 = vmatmul.mubr.bf16.gmra.mrb[0].mxu0 %v594
        %v1129 = vpop.f32.mrb[0].mxu0
        %v1130 = vadd.f32 %v1017, %v1129
        %v1131 = vpop.f32.mrb[0].mxu0
        %v1132 = vadd.f32 %v1019, %v1131
        %v1133 = vpop.f32.mrb[0].mxu0
        %v1134 = vadd.f32 %v1021, %v1133
        %v1135 = vpop.f32.mrb[0].mxu0
        %v1136 = vadd.f32 %v1023, %v1135
        %1137 = vmatprep.mubr.bf16.mxu0 %v599
        %1138 = vmatmul.mubr.bf16.gmra.mrb[0].mxu0 %v598
        %v1139 = vpop.f32.mrb[0].mxu0
        %v1140 = vadd.f32 %v1027, %v1139
        %v1141 = vpop.f32.mrb[0].mxu0
        %v1142 = vadd.f32 %v1029, %v1141
        %v1143 = vpop.f32.mrb[0].mxu0
        %v1144 = vadd.f32 %v1031, %v1143
        %v1145 = vpop.f32.mrb[0].mxu0
        %v1146 = vadd.f32 %v1033, %v1145
        %1147 = vmatprep.mubr.bf16.mxu0 %v603
        %1148 = vmatmul.mubr.bf16.gmra.mrb[0].mxu0 %v602
        %v1149 = vpop.f32.mrb[0].mxu0
        %v1150 = vadd.f32 %v1037, %v1149
        %v1151 = vpop.f32.mrb[0].mxu0
        %v1152 = vadd.f32 %v1039, %v1151
        %v1153 = vpop.f32.mrb[0].mxu0
        %v1154 = vadd.f32 %v1041, %v1153
        %v1155 = vpop.f32.mrb[0].mxu0
        %v1156 = vadd.f32 %v1043, %v1155
        %1157 = vmatprep.mubr.bf16.mxu0 %v607
        %1158 = vmatmul.mubr.bf16.gmra.mrb[0].mxu0 %v606
        %v1159 = vpop.f32.mrb[0].mxu0
        %v1160 = vadd.f32 %v1047, %v1159
        %v1161 = vpop.f32.mrb[0].mxu0
        %v1162 = vadd.f32 %v1049, %v1161
        %v1163 = vpop.f32.mrb[0].mxu0
        %v1164 = vadd.f32 %v1051, %v1163
        %v1165 = vpop.f32.mrb[0].mxu0
        %v1166 = vadd.f32 %v1053, %v1165
        %1167 = vmatprep.mubr.bf16.mxu0 %v611
        %1168 = vmatmul.mubr.bf16.gmra.mrb[0].mxu0 %v610
        %v1169 = vpop.f32.mrb[0].mxu0
        %v1170 = vadd.f32 %v1057, %v1169
        %v1171 = vpop.f32.mrb[0].mxu0
        %v1172 = vadd.f32 %v1059, %v1171
        %v1173 = vpop.f32.mrb[0].mxu0
        %v1174 = vadd.f32 %v1061, %v1173
        %v1175 = vpop.f32.mrb[0].mxu0
        %v1176 = vadd.f32 %v1063, %v1175
        %1177 = vmatprep.mubr.bf16.mxu0 %v615
        %1178 = vmatmul.mubr.bf16.gmra.mrb[0].mxu0 %v614
        %v1179 = vpop.f32.mrb[0].mxu0
        %v1180 = vadd.f32 %v1067, %v1179
        %v1181 = vpop.f32.mrb[0].mxu0
        %v1182 = vadd.f32 %v1069, %v1181
        %v1183 = vpop.f32.mrb[0].mxu0
        %v1184 = vadd.f32 %v1071, %v1183
        %v1185 = vpop.f32.mrb[0].mxu0
        %v1186 = vadd.f32 %v1073, %v1185
        %1187 = vmatprep.mubr.bf16.mxu0 %v619
        %1188 = vmatmul.mubr.bf16.gmra.mrb[0].mxu0 %v618
        %v1189 = vpop.f32.mrb[0].mxu0
        %v1190 = vadd.f32 %v1077, %v1189
        %v1191 = vpop.f32.mrb[0].mxu0
        %v1192 = vadd.f32 %v1079, %v1191
        %v1193 = vpop.f32.mrb[0].mxu0
        %v1194 = vadd.f32 %v1081, %v1193
        %v1195 = vpop.f32.mrb[0].mxu0
        %v1196 = vadd.f32 %v1083, %v1195
        %1197 = vdwg.mxu0
        %vm1198 = vcmp.gt.f32.partialorder %v1120, 0.0
        %vm1199 = vcmp.gt.f32.partialorder %v1122, 0.0
        %vm1200 = vcmp.gt.f32.partialorder %v1124, 0.0
        %vm1201 = vcmp.gt.f32.partialorder %v1126, 0.0
        %vm1202 = vcmp.gt.f32.partialorder %v1130, 0.0
        %vm1203 = vcmp.gt.f32.partialorder %v1132, 0.0
        %vm1204 = vcmp.gt.f32.partialorder %v1134, 0.0
        %vm1205 = vcmp.gt.f32.partialorder %v1136, 0.0
        %vm1206 = vcmp.gt.f32.partialorder %v1140, 0.0
        %vm1207 = vcmp.gt.f32.partialorder %v1142, 0.0
        %vm1208 = vcmp.gt.f32.partialorder %v1144, 0.0
        %vm1209 = vcmp.gt.f32.partialorder %v1146, 0.0
        %vm1210 = vcmp.gt.f32.partialorder %v1150, 0.0
        %vm1211 = vcmp.gt.f32.partialorder %v1152, 0.0
        %vm1212 = vcmp.gt.f32.partialorder %v1154, 0.0
        %vm1213 = vcmp.gt.f32.partialorder %v1156, 0.0
        %vm1214 = vcmp.gt.f32.partialorder %v1160, 0.0
        %vm1215 = vcmp.gt.f32.partialorder %v1162, 0.0
        %vm1216 = vcmp.gt.f32.partialorder %v1164, 0.0
        %vm1217 = vcmp.gt.f32.partialorder %v1166, 0.0
        %vm1218 = vcmp.gt.f32.partialorder %v1170, 0.0
        %vm1219 = vcmp.gt.f32.partialorder %v1172, 0.0
        %vm1220 = vcmp.gt.f32.partialorder %v1174, 0.0
        %vm1221 = vcmp.gt.f32.partialorder %v1176, 0.0
        %vm1222 = vcmp.gt.f32.partialorder %v1180, 0.0
        %vm1223 = vcmp.gt.f32.partialorder %v1182, 0.0
        %vm1224 = vcmp.gt.f32.partialorder %v1184, 0.0
        %vm1225 = vcmp.gt.f32.partialorder %v1186, 0.0
        %vm1226 = vcmp.gt.f32.partialorder %v1190, 0.0
        %vm1227 = vcmp.gt.f32.partialorder %v1192, 0.0
        %vm1228 = vcmp.gt.f32.partialorder %v1194, 0.0
        %vm1229 = vcmp.gt.f32.partialorder %v1196, 0.0
        %v1230 = vmin.f32 %v1120, 0.0
        %v1231 = vmin.f32 %v1122, 0.0
        %v1232 = vmin.f32 %v1124, 0.0
        %v1233 = vmin.f32 %v1126, 0.0
        %v1234 = vmin.f32 %v1130, 0.0
        %v1235 = vmin.f32 %v1132, 0.0
        %v1236 = vmin.f32 %v1134, 0.0
        %v1237 = vmin.f32 %v1136, 0.0
        %v1238 = vmin.f32 %v1140, 0.0
        %v1239 = vmin.f32 %v1142, 0.0
        %v1240 = vmin.f32 %v1144, 0.0
        %v1241 = vmin.f32 %v1146, 0.0
        %v1242 = vmin.f32 %v1150, 0.0
        %v1243 = vmin.f32 %v1152, 0.0
        %v1244 = vmin.f32 %v1154, 0.0
        %v1245 = vmin.f32 %v1156, 0.0
        %v1246 = vmin.f32 %v1160, 0.0
        %v1247 = vmin.f32 %v1162, 0.0
        %v1248 = vmin.f32 %v1164, 0.0
        %v1249 = vmin.f32 %v1166, 0.0
        %v1250 = vmin.f32 %v1170, 0.0
        %v1251 = vmin.f32 %v1172, 0.0
        %v1252 = vmin.f32 %v1174, 0.0
        %v1253 = vmin.f32 %v1176, 0.0
        %v1254 = vmin.f32 %v1180, 0.0
        %v1255 = vmin.f32 %v1182, 0.0
        %v1256 = vmin.f32 %v1184, 0.0
        %v1257 = vmin.f32 %v1186, 0.0
        %v1258 = vmin.f32 %v1190, 0.0
        %v1259 = vmin.f32 %v1192, 0.0
        %v1260 = vmin.f32 %v1194, 0.0
        %v1261 = vmin.f32 %v1196, 0.0
        %v1262 = vmul.f32 %v1230, 1.442695
        %v1263 = vpow.pop %v1262
        %v1264 = vmul.f32 %v1231, 1.442695
        %v1265 = vpow.pop %v1264
        %v1266 = vmul.f32 %v1232, 1.442695
        %v1267 = vpow.pop %v1266
        %v1268 = vmul.f32 %v1233, 1.442695
        %v1269 = vpow.pop %v1268
        %v1270 = vmul.f32 %v1234, 1.442695
        %v1271 = vpow.pop %v1270
        %v1272 = vmul.f32 %v1235, 1.442695
        %v1273 = vpow.pop %v1272
        %v1274 = vmul.f32 %v1236, 1.442695
        %v1275 = vpow.pop %v1274
        %v1276 = vmul.f32 %v1237, 1.442695
        %v1277 = vpow.pop %v1276
        %v1278 = vmul.f32 %v1238, 1.442695
        %v1279 = vpow.pop %v1278
        %v1280 = vmul.f32 %v1239, 1.442695
        %v1281 = vpow.pop %v1280
        %v1282 = vmul.f32 %v1240, 1.442695
        %v1283 = vpow.pop %v1282
        %v1284 = vmul.f32 %v1241, 1.442695
        %v1285 = vpow.pop %v1284
        %v1286 = vmul.f32 %v1242, 1.442695
        %v1287 = vpow.pop %v1286
        %v1288 = vmul.f32 %v1243, 1.442695
        %v1289 = vpow.pop %v1288
        %v1290 = vmul.f32 %v1244, 1.442695
        %v1291 = vpow.pop %v1290
        %v1292 = vmul.f32 %v1245, 1.442695
        %v1293 = vpow.pop %v1292
        %v1294 = vmul.f32 %v1246, 1.442695
        %v1295 = vpow.pop %v1294
        %v1296 = vmul.f32 %v1247, 1.442695
        %v1297 = vpow.pop %v1296
        %v1298 = vmul.f32 %v1248, 1.442695
        %v1299 = vpow.pop %v1298
        %v1300 = vmul.f32 %v1249, 1.442695
        %v1301 = vpow.pop %v1300
        %v1302 = vmul.f32 %v1250, 1.442695
        %v1303 = vpow.pop %v1302
        %v1304 = vmul.f32 %v1251, 1.442695
        %v1305 = vpow.pop %v1304
        %v1306 = vmul.f32 %v1252, 1.442695
        %v1307 = vpow.pop %v1306
        %v1308 = vmul.f32 %v1253, 1.442695
        %v1309 = vpow.pop %v1308
        %v1310 = vmul.f32 %v1254, 1.442695
        %v1311 = vpow.pop %v1310
        %v1312 = vmul.f32 %v1255, 1.442695
        %v1313 = vpow.pop %v1312
        %v1314 = vmul.f32 %v1256, 1.442695
        %v1315 = vpow.pop %v1314
        %v1316 = vmul.f32 %v1257, 1.442695
        %v1317 = vpow.pop %v1316
        %v1318 = vmul.f32 %v1258, 1.442695
        %v1319 = vpow.pop %v1318
        %v1320 = vmul.f32 %v1259, 1.442695
        %v1321 = vpow.pop %v1320
        %v1322 = vmul.f32 %v1260, 1.442695
        %v1323 = vpow.pop %v1322
        %v1324 = vmul.f32 %v1261, 1.442695
        %v1325 = vpow.pop %v1324
        %v1326 = vsub.f32 %v1263, 1.0
        %v1327 = vsub.f32 %v1265, 1.0
        %v1328 = vsub.f32 %v1267, 1.0
        %v1329 = vsub.f32 %v1269, 1.0
        %v1330 = vsub.f32 %v1271, 1.0
        %v1331 = vsub.f32 %v1273, 1.0
        %v1332 = vsub.f32 %v1275, 1.0
        %v1333 = vsub.f32 %v1277, 1.0
        %v1334 = vsub.f32 %v1279, 1.0
        %v1335 = vsub.f32 %v1281, 1.0
        %v1336 = vsub.f32 %v1283, 1.0
        %v1337 = vsub.f32 %v1285, 1.0
        %v1338 = vsub.f32 %v1287, 1.0
        %v1339 = vsub.f32 %v1289, 1.0
        %v1340 = vsub.f32 %v1291, 1.0
        %v1341 = vsub.f32 %v1293, 1.0
        %v1342 = vsub.f32 %v1295, 1.0
        %v1343 = vsub.f32 %v1297, 1.0
        %v1344 = vsub.f32 %v1299, 1.0
        %v1345 = vsub.f32 %v1301, 1.0
        %v1346 = vsub.f32 %v1303, 1.0
        %v1347 = vsub.f32 %v1305, 1.0
        %v1348 = vsub.f32 %v1307, 1.0
        %v1349 = vsub.f32 %v1309, 1.0
        %v1350 = vsub.f32 %v1311, 1.0
        %v1351 = vsub.f32 %v1313, 1.0
        %v1352 = vsub.f32 %v1315, 1.0
        %v1353 = vsub.f32 %v1317, 1.0
        %v1354 = vsub.f32 %v1319, 1.0
        %v1355 = vsub.f32 %v1321, 1.0
        %v1356 = vsub.f32 %v1323, 1.0
        %v1357 = vsub.f32 %v1325, 1.0
        %v1358 = vsel %vm1198, %v1120, %v1326
        %v1359 = vsel %vm1199, %v1122, %v1327
        %v1360 = vsel %vm1200, %v1124, %v1328
        %v1361 = vsel %vm1201, %v1126, %v1329
        %v1362 = vsel %vm1202, %v1130, %v1330
        %v1363 = vsel %vm1203, %v1132, %v1331
        %v1364 = vsel %vm1204, %v1134, %v1332
        %v1365 = vsel %vm1205, %v1136, %v1333
        %v1366 = vsel %vm1206, %v1140, %v1334
        %v1367 = vsel %vm1207, %v1142, %v1335
        %v1368 = vsel %vm1208, %v1144, %v1336
        %v1369 = vsel %vm1209, %v1146, %v1337
        %v1370 = vsel %vm1210, %v1150, %v1338
        %v1371 = vsel %vm1211, %v1152, %v1339
        %v1372 = vsel %vm1212, %v1154, %v1340
        %v1373 = vsel %vm1213, %v1156, %v1341
        %v1374 = vsel %vm1214, %v1160, %v1342
        %v1375 = vsel %vm1215, %v1162, %v1343
        %v1376 = vsel %vm1216, %v1164, %v1344
        %v1377 = vsel %vm1217, %v1166, %v1345
        %v1378 = vsel %vm1218, %v1170, %v1346
        %v1379 = vsel %vm1219, %v1172, %v1347
        %v1380 = vsel %vm1220, %v1174, %v1348
        %v1381 = vsel %vm1221, %v1176, %v1349
        %v1382 = vsel %vm1222, %v1180, %v1350
        %v1383 = vsel %vm1223, %v1182, %v1351
        %v1384 = vsel %vm1224, %v1184, %v1352
        %v1385 = vsel %vm1225, %v1186, %v1353
        %v1386 = vsel %vm1226, %v1190, %v1354
        %v1387 = vsel %vm1227, %v1192, %v1355
        %v1388 = vsel %vm1228, %v1194, %v1356
        %v1389 = vsel %vm1229, %v1196, %v1357
        %v1390 = vld [vmem:[%s3] sm:$0xff]
        %v1391 = vld [vmem:[%s3 + $0x8] sm:$0xff]
        %v1392 = vld [vmem:[%s3 + $0x10] sm:$0xff]
        %v1393 = vld [vmem:[%s3 + $0x18] sm:$0xff]
        %v1394 = vld [vmem:[%s3 + $0x20] sm:$0xff]
        %v1395 = vld [vmem:[%s3 + $0x28] sm:$0xff]
        %v1396 = vld [vmem:[%s3 + $0x30] sm:$0xff]
        %v1397 = vld [vmem:[%s3 + $0x38] sm:$0xff]
        %v1398 = vld [vmem:[%s3 + $0x40] sm:$0xff]
        %v1399 = vld [vmem:[%s3 + $0x48] sm:$0xff]
        %v1400 = vld [vmem:[%s3 + $0x50] sm:$0xff]
        %v1401 = vld [vmem:[%s3 + $0x58] sm:$0xff]
        %v1402 = vld [vmem:[%s3 + $0x60] sm:$0xff]
        %v1403 = vld [vmem:[%s3 + $0x68] sm:$0xff]
        %v1404 = vld [vmem:[%s3 + $0x70] sm:$0xff]
        %v1405 = vld [vmem:[%s3 + $0x78] sm:$0xff]
        %v1406 = vld [vmem:[%s3 + $0x80] sm:$0xff]
        %v1407 = vld [vmem:[%s3 + $0x88] sm:$0xff]
        %v1408 = vld [vmem:[%s3 + $0x90] sm:$0xff]
        %v1409 = vld [vmem:[%s3 + $0x98] sm:$0xff]
        %v1410 = vld [vmem:[%s3 + $0xa0] sm:$0xff]
        %v1411 = vld [vmem:[%s3 + $0xa8] sm:$0xff]
        %v1412 = vld [vmem:[%s3 + $0xb0] sm:$0xff]
        %v1413 = vld [vmem:[%s3 + $0xb8] sm:$0xff]
        %v1414 = vld [vmem:[%s3 + $0xc0] sm:$0xff]
        %v1415 = vld [vmem:[%s3 + $0xc8] sm:$0xff]
        %v1416 = vld [vmem:[%s3 + $0xd0] sm:$0xff]
        %v1417 = vld [vmem:[%s3 + $0xd8] sm:$0xff]
        %v1418 = vld [vmem:[%s3 + $0xe0] sm:$0xff]
        %v1419 = vld [vmem:[%s3 + $0xe8] sm:$0xff]
        %v1420 = vld [vmem:[%s3 + $0xf0] sm:$0xff]
        %v1421 = vld [vmem:[%s3 + $0xf8] sm:$0xff]
        %v1422 = vld [vmem:[%s3 + $0x100] sm:$0xff]
        %v1423 = vld [vmem:[%s3 + $0x108] sm:$0xff]
        %v1424 = vld [vmem:[%s3 + $0x110] sm:$0xff]
        %v1425 = vld [vmem:[%s3 + $0x118] sm:$0xff]
        %v1426 = vld [vmem:[%s3 + $0x120] sm:$0xff]
        %v1427 = vld [vmem:[%s3 + $0x128] sm:$0xff]
        %v1428 = vld [vmem:[%s3 + $0x130] sm:$0xff]
        %v1429 = vld [vmem:[%s3 + $0x138] sm:$0xff]
        %v1430 = vld [vmem:[%s3 + $0x140] sm:$0xff]
        %v1431 = vld [vmem:[%s3 + $0x148] sm:$0xff]
        %v1432 = vld [vmem:[%s3 + $0x150] sm:$0xff]
        %v1433 = vld [vmem:[%s3 + $0x158] sm:$0xff]
        %v1434 = vld [vmem:[%s3 + $0x160] sm:$0xff]
        %v1435 = vld [vmem:[%s3 + $0x168] sm:$0xff]
        %v1436 = vld [vmem:[%s3 + $0x170] sm:$0xff]
        %v1437 = vld [vmem:[%s3 + $0x178] sm:$0xff]
        %v1438 = vld [vmem:[%s3 + $0x180] sm:$0xff]
        %v1439 = vld [vmem:[%s3 + $0x188] sm:$0xff]
        %v1440 = vld [vmem:[%s3 + $0x190] sm:$0xff]
        %v1441 = vld [vmem:[%s3 + $0x198] sm:$0xff]
        %v1442 = vld [vmem:[%s3 + $0x1a0] sm:$0xff]
        %v1443 = vld [vmem:[%s3 + $0x1a8] sm:$0xff]
        %v1444 = vld [vmem:[%s3 + $0x1b0] sm:$0xff]
        %v1445 = vld [vmem:[%s3 + $0x1b8] sm:$0xff]
        %v1446 = vld [vmem:[%s3 + $0x1c0] sm:$0xff]
        %v1447 = vld [vmem:[%s3 + $0x1c8] sm:$0xff]
        %v1448 = vld [vmem:[%s3 + $0x1d0] sm:$0xff]
        %v1449 = vld [vmem:[%s3 + $0x1d8] sm:$0xff]
        %v1450 = vld [vmem:[%s3 + $0x1e0] sm:$0xff]
        %v1451 = vld [vmem:[%s3 + $0x1e8] sm:$0xff]
        %v1452 = vld [vmem:[%s3 + $0x1f0] sm:$0xff]
        %v1453 = vld [vmem:[%s3 + $0x1f8] sm:$0xff]
        %v1454 = vld [vmem:[%s4] sm:$0x3]
        %v1456 = vlaneseq
        %v1457 = vshrl.u32 %v1456, 7
        %v1458 = vsub.s32 0, %v1457
        %v1459 = vrot.slane %v1454, %v1458
        %v1460 = vlaneseq
        %v1461 = vshrl.u32 %v1460, 7
        %v1462 = vsub.s32 1, %v1461
        %v1463 = vrot.slane %v1454, %v1462
        %1466 = vmatprep.subr.mxu0 %v1391
        %1467 = vmatpush1.msra.mxu0 %v1390
        %1468 = vmatprep.subr.mxu0 %v1393
        %1469 = vmatpush1.msra.mxu0 %v1392
        %1470 = vmatprep.subr.mxu0 %v1395
        %1471 = vmatpush1.msra.mxu0 %v1394
        %1472 = vmatprep.subr.mxu0 %v1397
        %1473 = vmatpush1.msra.mxu0 %v1396
        %1474 = vmatprep.subr.mxu0 %v1399
        %1475 = vmatpush1.msra.mxu0 %v1398
        %1476 = vmatprep.subr.mxu0 %v1401
        %1477 = vmatpush1.msra.mxu0 %v1400
        %1478 = vmatprep.subr.mxu0 %v1403
        %1479 = vmatpush1.msra.mxu0 %v1402
        %1480 = vmatprep.subr.mxu0 %v1405
        %1481 = vmatpush1.msra.mxu0 %v1404
        %1482 = vmatprep.subr.mxu0 %v1407
        %1483 = vmatpush1.msra.mxu0 %v1406
        %1484 = vmatprep.subr.mxu0 %v1409
        %1485 = vmatpush1.msra.mxu0 %v1408
        %1486 = vmatprep.subr.mxu0 %v1411
        %1487 = vmatpush1.msra.mxu0 %v1410
        %1488 = vmatprep.subr.mxu0 %v1413
        %1489 = vmatpush1.msra.mxu0 %v1412
        %1490 = vmatprep.subr.mxu0 %v1415
        %1491 = vmatpush1.msra.mxu0 %v1414
        %1492 = vmatprep.subr.mxu0 %v1417
        %1493 = vmatpush1.msra.mxu0 %v1416
        %1494 = vmatprep.subr.mxu0 %v1419
        %1495 = vmatpush1.msra.mxu0 %v1418
        %1496 = vmatprep.subr.mxu0 %v1421
        %1497 = vmatpush1.msra.mxu0 %v1420
        %1498 = vmatprep.subr.mxu0 %v1423
        %1499 = vmatpush1.msra.mxu0 %v1422
        %1500 = vmatprep.subr.mxu0 %v1425
        %1501 = vmatpush1.msra.mxu0 %v1424
        %1502 = vmatprep.subr.mxu0 %v1427
        %1503 = vmatpush1.msra.mxu0 %v1426
        %1504 = vmatprep.subr.mxu0 %v1429
        %1505 = vmatpush1.msra.mxu0 %v1428
        %1506 = vmatprep.subr.mxu0 %v1431
        %1507 = vmatpush1.msra.mxu0 %v1430
        %1508 = vmatprep.subr.mxu0 %v1433
        %1509 = vmatpush1.msra.mxu0 %v1432
        %1510 = vmatprep.subr.mxu0 %v1435
        %1511 = vmatpush1.msra.mxu0 %v1434
        %1512 = vmatprep.subr.mxu0 %v1437
        %1513 = vmatpush1.msra.mxu0 %v1436
        %1514 = vmatprep.subr.mxu0 %v1439
        %1515 = vmatpush1.msra.mxu0 %v1438
        %1516 = vmatprep.subr.mxu0 %v1441
        %1517 = vmatpush1.msra.mxu0 %v1440
        %1518 = vmatprep.subr.mxu0 %v1443
        %1519 = vmatpush1.msra.mxu0 %v1442
        %1520 = vmatprep.subr.mxu0 %v1445
        %1521 = vmatpush1.msra.mxu0 %v1444
        %1522 = vmatprep.subr.mxu0 %v1447
        %1523 = vmatpush1.msra.mxu0 %v1446
        %1524 = vmatprep.subr.mxu0 %v1449
        %1525 = vmatpush1.msra.mxu0 %v1448
        %1526 = vmatprep.subr.mxu0 %v1451
        %1527 = vmatpush1.msra.mxu0 %v1450
        %1528 = vmatprep.subr.mxu0 %v1453
        %1529 = vmatpush1.msra.mxu0 %v1452
        %1530 = vmatprep.mubr.f32.mxu0 %v1359
        %1531 = vmatmul.mubr.f32.gmra.mrb[0].mxu0 %v1358
        %v1532 = vpop.f32.mrb[0].mxu0
        %v1533 = vadd.f32 %v1459, %v1532
        %v1534 = vpop.f32.mrb[0].mxu0
        %v1535 = vadd.f32 %v1463, %v1534
        %1536 = vmatprep.mubr.f32.mxu0 %v1361
        %1537 = vmatmul.mubr.f32.gmra.mrb[0].mxu0 %v1360
        %v1538 = vpop.f32.mrb[0].mxu0
        %v1539 = vadd.f32 %v1459, %v1538
        %v1540 = vpop.f32.mrb[0].mxu0
        %v1541 = vadd.f32 %v1463, %v1540
        %1542 = vmatprep.mubr.f32.mxu0 %v1363
        %1543 = vmatmul.mubr.f32.gmra.mrb[0].mxu0 %v1362
        %v1544 = vpop.f32.mrb[0].mxu0
        %v1545 = vadd.f32 %v1459, %v1544
        %v1546 = vpop.f32.mrb[0].mxu0
        %v1547 = vadd.f32 %v1463, %v1546
        %1548 = vmatprep.mubr.f32.mxu0 %v1365
        %1549 = vmatmul.mubr.f32.gmra.mrb[0].mxu0 %v1364
        %v1550 = vpop.f32.mrb[0].mxu0
        %v1551 = vadd.f32 %v1459, %v1550
        %v1552 = vpop.f32.mrb[0].mxu0
        %v1553 = vadd.f32 %v1463, %v1552
        %1554 = vmatprep.mubr.f32.mxu0 %v1367
        %1555 = vmatmul.mubr.f32.gmra.mrb[0].mxu0 %v1366
        %v1556 = vpop.f32.mrb[0].mxu0
        %v1557 = vadd.f32 %v1459, %v1556
        %v1558 = vpop.f32.mrb[0].mxu0
        %v1559 = vadd.f32 %v1463, %v1558
        %1560 = vmatprep.mubr.f32.mxu0 %v1369
        %1561 = vmatmul.mubr.f32.gmra.mrb[0].mxu0 %v1368
        %v1562 = vpop.f32.mrb[0].mxu0
        %v1563 = vadd.f32 %v1459, %v1562
        %v1564 = vpop.f32.mrb[0].mxu0
        %v1565 = vadd.f32 %v1463, %v1564
        %1566 = vmatprep.mubr.f32.mxu0 %v1371
        %1567 = vmatmul.mubr.f32.gmra.mrb[0].mxu0 %v1370
        %v1568 = vpop.f32.mrb[0].mxu0
        %v1569 = vadd.f32 %v1459, %v1568
        %v1570 = vpop.f32.mrb[0].mxu0
        %v1571 = vadd.f32 %v1463, %v1570
        %1572 = vmatprep.mubr.f32.mxu0 %v1373
        %1573 = vmatmul.mubr.f32.gmra.mrb[0].mxu0 %v1372
        %v1574 = vpop.f32.mrb[0].mxu0
        %v1575 = vadd.f32 %v1459, %v1574
        %v1576 = vpop.f32.mrb[0].mxu0
        %v1577 = vadd.f32 %v1463, %v1576
        %1578 = vmatprep.mubr.f32.mxu0 %v1375
        %1579 = vmatmul.mubr.f32.gmra.mrb[0].mxu0 %v1374
        %v1580 = vpop.f32.mrb[0].mxu0
        %v1581 = vadd.f32 %v1459, %v1580
        %v1582 = vpop.f32.mrb[0].mxu0
        %v1583 = vadd.f32 %v1463, %v1582
        %1584 = vmatprep.mubr.f32.mxu0 %v1377
        %1585 = vmatmul.mubr.f32.gmra.mrb[0].mxu0 %v1376
        %v1586 = vpop.f32.mrb[0].mxu0
        %v1587 = vadd.f32 %v1459, %v1586
        %v1588 = vpop.f32.mrb[0].mxu0
        %v1589 = vadd.f32 %v1463, %v1588
        %1590 = vmatprep.mubr.f32.mxu0 %v1379
        %1591 = vmatmul.mubr.f32.gmra.mrb[0].mxu0 %v1378
        %v1592 = vpop.f32.mrb[0].mxu0
        %v1593 = vadd.f32 %v1459, %v1592
        %v1594 = vpop.f32.mrb[0].mxu0
        %v1595 = vadd.f32 %v1463, %v1594
        %1596 = vmatprep.mubr.f32.mxu0 %v1381
        %1597 = vmatmul.mubr.f32.gmra.mrb[0].mxu0 %v1380
        %v1598 = vpop.f32.mrb[0].mxu0
        %v1599 = vadd.f32 %v1459, %v1598
        %v1600 = vpop.f32.mrb[0].mxu0
        %v1601 = vadd.f32 %v1463, %v1600
        %1602 = vmatprep.mubr.f32.mxu0 %v1383
        %1603 = vmatmul.mubr.f32.gmra.mrb[0].mxu0 %v1382
        %v1604 = vpop.f32.mrb[0].mxu0
        %v1605 = vadd.f32 %v1459, %v1604
        %v1606 = vpop.f32.mrb[0].mxu0
        %v1607 = vadd.f32 %v1463, %v1606
        %1608 = vmatprep.mubr.f32.mxu0 %v1385
        %1609 = vmatmul.mubr.f32.gmra.mrb[0].mxu0 %v1384
        %v1610 = vpop.f32.mrb[0].mxu0
        %v1611 = vadd.f32 %v1459, %v1610
        %v1612 = vpop.f32.mrb[0].mxu0
        %v1613 = vadd.f32 %v1463, %v1612
        %1614 = vmatprep.mubr.f32.mxu0 %v1387
        %1615 = vmatmul.mubr.f32.gmra.mrb[0].mxu0 %v1386
        %v1616 = vpop.f32.mrb[0].mxu0
        %v1617 = vadd.f32 %v1459, %v1616
        %v1618 = vpop.f32.mrb[0].mxu0
        %v1619 = vadd.f32 %v1463, %v1618
        %1620 = vmatprep.mubr.f32.mxu0 %v1389
        %1621 = vmatmul.mubr.f32.gmra.mrb[0].mxu0 %v1388
        %v1622 = vpop.f32.mrb[0].mxu0
        %v1623 = vadd.f32 %v1459, %v1622
        %v1624 = vpop.f32.mrb[0].mxu0
        %v1625 = vadd.f32 %v1463, %v1624
        %1626 = vdwg.mxu0
        %v1627 = vtanh.pop %v1533
        %v1628 = vtanh.pop %v1539
        %v1629 = vtanh.pop %v1545
        %v1630 = vtanh.pop %v1551
        %v1631 = vtanh.pop %v1557
        %v1632 = vtanh.pop %v1563
        %v1633 = vtanh.pop %v1569
        %v1634 = vtanh.pop %v1575
        %v1635 = vtanh.pop %v1581
        %v1636 = vtanh.pop %v1587
        %v1637 = vtanh.pop %v1593
        %v1638 = vtanh.pop %v1599
        %v1639 = vtanh.pop %v1605
        %v1640 = vtanh.pop %v1611
        %v1641 = vtanh.pop %v1617
        %v1642 = vtanh.pop %v1623
        %v1643 = vxor.u32 %v1535, 2147483648
        %v1644 = vxor.u32 %v1541, 2147483648
        %v1645 = vxor.u32 %v1547, 2147483648
        %v1646 = vxor.u32 %v1553, 2147483648
        %v1647 = vxor.u32 %v1559, 2147483648
        %v1648 = vxor.u32 %v1565, 2147483648
        %v1649 = vxor.u32 %v1571, 2147483648
        %v1650 = vxor.u32 %v1577, 2147483648
        %v1651 = vxor.u32 %v1583, 2147483648
        %v1652 = vxor.u32 %v1589, 2147483648
        %v1653 = vxor.u32 %v1595, 2147483648
        %v1654 = vxor.u32 %v1601, 2147483648
        %v1655 = vxor.u32 %v1607, 2147483648
        %v1656 = vxor.u32 %v1613, 2147483648
        %v1657 = vxor.u32 %v1619, 2147483648
        %v1658 = vxor.u32 %v1625, 2147483648
        %v1659 = vmul.f32 %v1643, 1.442695
        %v1660 = vpow.pop %v1659
        %v1661 = vmul.f32 %v1644, 1.442695
        %v1662 = vpow.pop %v1661
        %v1663 = vmul.f32 %v1645, 1.442695
        %v1664 = vpow.pop %v1663
        %v1665 = vmul.f32 %v1646, 1.442695
        %v1666 = vpow.pop %v1665
        %v1667 = vmul.f32 %v1647, 1.442695
        %v1668 = vpow.pop %v1667
        %v1669 = vmul.f32 %v1648, 1.442695
        %v1670 = vpow.pop %v1669
        %v1671 = vmul.f32 %v1649, 1.442695
        %v1672 = vpow.pop %v1671
        %v1673 = vmul.f32 %v1650, 1.442695
        %v1674 = vpow.pop %v1673
        %v1675 = vmul.f32 %v1651, 1.442695
        %v1676 = vpow.pop %v1675
        %v1677 = vmul.f32 %v1652, 1.442695
        %v1678 = vpow.pop %v1677
        %v1679 = vmul.f32 %v1653, 1.442695
        %v1680 = vpow.pop %v1679
        %v1681 = vmul.f32 %v1654, 1.442695
        %v1682 = vpow.pop %v1681
        %v1683 = vmul.f32 %v1655, 1.442695
        %v1684 = vpow.pop %v1683
        %v1685 = vmul.f32 %v1656, 1.442695
        %v1686 = vpow.pop %v1685
        %v1687 = vmul.f32 %v1657, 1.442695
        %v1688 = vpow.pop %v1687
        %v1689 = vmul.f32 %v1658, 1.442695
        %v1690 = vpow.pop %v1689
        %v1691 = vadd.f32 %v1660, 1.0
        %v1692 = vadd.f32 %v1662, 1.0
        %v1693 = vadd.f32 %v1664, 1.0
        %v1694 = vadd.f32 %v1666, 1.0
        %v1695 = vadd.f32 %v1668, 1.0
        %v1696 = vadd.f32 %v1670, 1.0
        %v1697 = vadd.f32 %v1672, 1.0
        %v1698 = vadd.f32 %v1674, 1.0
        %v1699 = vadd.f32 %v1676, 1.0
        %v1700 = vadd.f32 %v1678, 1.0
        %v1701 = vadd.f32 %v1680, 1.0
        %v1702 = vadd.f32 %v1682, 1.0
        %v1703 = vadd.f32 %v1684, 1.0
        %v1704 = vadd.f32 %v1686, 1.0
        %v1705 = vadd.f32 %v1688, 1.0
        %v1706 = vadd.f32 %v1690, 1.0
        %v1707 = vrcp.pop %v1691
        %v1708 = vmul.f32 1.0, %v1707
        %v1709 = vrcp.pop %v1692
        %v1710 = vmul.f32 1.0, %v1709
        %v1711 = vrcp.pop %v1693
        %v1712 = vmul.f32 1.0, %v1711
        %v1713 = vrcp.pop %v1694
        %v1714 = vmul.f32 1.0, %v1713
        %v1715 = vrcp.pop %v1695
        %v1716 = vmul.f32 1.0, %v1715
        %v1717 = vrcp.pop %v1696
        %v1718 = vmul.f32 1.0, %v1717
        %v1719 = vrcp.pop %v1697
        %v1720 = vmul.f32 1.0, %v1719
        %v1721 = vrcp.pop %v1698
        %v1722 = vmul.f32 1.0, %v1721
        %v1723 = vrcp.pop %v1699
        %v1724 = vmul.f32 1.0, %v1723
        %v1725 = vrcp.pop %v1700
        %v1726 = vmul.f32 1.0, %v1725
        %v1727 = vrcp.pop %v1701
        %v1728 = vmul.f32 1.0, %v1727
        %v1729 = vrcp.pop %v1702
        %v1730 = vmul.f32 1.0, %v1729
        %v1731 = vrcp.pop %v1703
        %v1732 = vmul.f32 1.0, %v1731
        %v1733 = vrcp.pop %v1704
        %v1734 = vmul.f32 1.0, %v1733
        %v1735 = vrcp.pop %v1705
        %v1736 = vmul.f32 1.0, %v1735
        %v1737 = vrcp.pop %v1706
        %v1738 = vmul.f32 1.0, %v1737
        %v1739 = vmul.f32 %v1627, %v1708
        %v1740 = vmul.f32 %v1628, %v1710
        %v1741 = vmul.f32 %v1629, %v1712
        %v1742 = vmul.f32 %v1630, %v1714
        %v1743 = vmul.f32 %v1631, %v1716
        %v1744 = vmul.f32 %v1632, %v1718
        %v1745 = vmul.f32 %v1633, %v1720
        %v1746 = vmul.f32 %v1634, %v1722
        %v1747 = vmul.f32 %v1635, %v1724
        %v1748 = vmul.f32 %v1636, %v1726
        %v1749 = vmul.f32 %v1637, %v1728
        %v1750 = vmul.f32 %v1638, %v1730
        %v1751 = vmul.f32 %v1639, %v1732
        %v1752 = vmul.f32 %v1640, %v1734
        %v1753 = vmul.f32 %v1641, %v1736
        %v1754 = vmul.f32 %v1642, %v1738
        %v1755 = vld [vmem:[%s5] sm:$0xff]
        %v1756 = vld [vmem:[%s5 + $0x8] sm:$0xff]
        %v1757 = vld [vmem:[%s5 + $0x10] sm:$0xff]
        %v1758 = vld [vmem:[%s5 + $0x18] sm:$0xff]
        %v1759 = vld [vmem:[%s5 + $0x20] sm:$0xff]
        %v1760 = vld [vmem:[%s5 + $0x28] sm:$0xff]
        %v1761 = vld [vmem:[%s5 + $0x30] sm:$0xff]
        %v1762 = vld [vmem:[%s5 + $0x38] sm:$0xff]
        %v1763 = vld [vmem:[%s5 + $0x40] sm:$0xff]
        %v1764 = vld [vmem:[%s5 + $0x48] sm:$0xff]
        %v1765 = vld [vmem:[%s5 + $0x50] sm:$0xff]
        %v1766 = vld [vmem:[%s5 + $0x58] sm:$0xff]
        %v1767 = vld [vmem:[%s5 + $0x60] sm:$0xff]
        %v1768 = vld [vmem:[%s5 + $0x68] sm:$0xff]
        %v1769 = vld [vmem:[%s5 + $0x70] sm:$0xff]
        %v1770 = vld [vmem:[%s5 + $0x78] sm:$0xff]
        %1771 = vmatprep.subr.mxu0 0.0
        %1772 = vmatpush1.msra.mxu0 %v1755
        %1773 = vmatprep.subr.mxu0 0.0
        %1774 = vmatpush1.msra.mxu0 %v1756
        %1775 = vmatprep.subr.mxu0 0.0
        %1776 = vmatpush1.msra.mxu0 %v1757
        %1777 = vmatprep.subr.mxu0 0.0
        %1778 = vmatpush1.msra.mxu0 %v1758
        %1779 = vmatprep.subr.mxu0 0.0
        %1780 = vmatpush1.msra.mxu0 %v1759
        %1781 = vmatprep.subr.mxu0 0.0
        %1782 = vmatpush1.msra.mxu0 %v1760
        %1783 = vmatprep.subr.mxu0 0.0
        %1784 = vmatpush1.msra.mxu0 %v1761
        %1785 = vmatprep.subr.mxu0 0.0
        %1786 = vmatpush1.msra.mxu0 %v1762
        %1787 = vmatprep.subr.mxu0 0.0
        %1788 = vmatpush1.msra.mxu0 %v1763
        %1789 = vmatprep.subr.mxu0 0.0
        %1790 = vmatpush1.msra.mxu0 %v1764
        %1791 = vmatprep.subr.mxu0 0.0
        %1792 = vmatpush1.msra.mxu0 %v1765
        %1793 = vmatprep.subr.mxu0 0.0
        %1794 = vmatpush1.msra.mxu0 %v1766
        %1795 = vmatprep.subr.mxu0 0.0
        %1796 = vmatpush1.msra.mxu0 %v1767
        %1797 = vmatprep.subr.mxu0 0.0
        %1798 = vmatpush1.msra.mxu0 %v1768
        %1799 = vmatprep.subr.mxu0 0.0
        %1800 = vmatpush1.msra.mxu0 %v1769
        %1801 = vmatprep.subr.mxu0 0.0
        %1802 = vmatpush1.msra.mxu0 %v1770
        %1803 = vmatprep.subr.mxu0 0.0
        %1804 = vmatpush1.msra.mxu0 0.0
        %1805 = vmatprep.subr.mxu0 0.0
        %1806 = vmatpush1.msra.mxu0 0.0
        %1807 = vmatprep.subr.mxu0 0.0
        %1808 = vmatpush1.msra.mxu0 0.0
        %1809 = vmatprep.subr.mxu0 0.0
        %1810 = vmatpush1.msra.mxu0 0.0
        %1811 = vmatprep.subr.mxu0 0.0
        %1812 = vmatpush1.msra.mxu0 0.0
        %1813 = vmatprep.subr.mxu0 0.0
        %1814 = vmatpush1.msra.mxu0 0.0
        %1815 = vmatprep.subr.mxu0 0.0
        %1816 = vmatpush1.msra.mxu0 0.0
        %1817 = vmatprep.subr.mxu0 0.0
        %1818 = vmatpush1.msra.mxu0 0.0
        %1819 = vmatprep.subr.mxu0 0.0
        %1820 = vmatpush1.msra.mxu0 0.0
        %1821 = vmatprep.subr.mxu0 0.0
        %1822 = vmatpush1.msra.mxu0 0.0
        %1823 = vmatprep.subr.mxu0 0.0
        %1824 = vmatpush1.msra.mxu0 0.0
        %1825 = vmatprep.subr.mxu0 0.0
        %1826 = vmatpush1.msra.mxu0 0.0
        %1827 = vmatprep.subr.mxu0 0.0
        %1828 = vmatpush1.msra.mxu0 0.0
        %1829 = vmatprep.subr.mxu0 0.0
        %1830 = vmatpush1.msra.mxu0 0.0
        %1831 = vmatprep.subr.mxu0 0.0
        %1832 = vmatpush1.msra.mxu0 0.0
        %1833 = vmatprep.subr.mxu0 0.0
        %1834 = vmatpush1.msra.mxu0 0.0
        %1835 = vmatprep.mubr.f32.mxu0 0.0
        %1836 = vmatmul.mubr.f32.gmra.mrb[0].mxu0 %v1739
        %v1837 = vpop.f32.mrb[0].mxu0
        %v1838 = vadd.f32 0.0, %v1837
        %v1839 = vpop.f32.mrb[0].mxu0
        %1840 = vmatprep.mubr.f32.mxu0 0.0
        %1841 = vmatmul.mubr.f32.gmra.mrb[0].mxu0 %v1740
        %v1842 = vpop.f32.mrb[0].mxu0
        %v1843 = vadd.f32 0.0, %v1842
        %v1844 = vpop.f32.mrb[0].mxu0
        %1845 = vmatprep.mubr.f32.mxu0 0.0
        %1846 = vmatmul.mubr.f32.gmra.mrb[0].mxu0 %v1741
        %v1847 = vpop.f32.mrb[0].mxu0
        %v1848 = vadd.f32 0.0, %v1847
        %v1849 = vpop.f32.mrb[0].mxu0
        %1850 = vmatprep.mubr.f32.mxu0 0.0
        %1851 = vmatmul.mubr.f32.gmra.mrb[0].mxu0 %v1742
        %v1852 = vpop.f32.mrb[0].mxu0
        %v1853 = vadd.f32 0.0, %v1852
        %v1854 = vpop.f32.mrb[0].mxu0
        %1855 = vmatprep.mubr.f32.mxu0 0.0
        %1856 = vmatmul.mubr.f32.gmra.mrb[0].mxu0 %v1743
        %v1857 = vpop.f32.mrb[0].mxu0
        %v1858 = vadd.f32 0.0, %v1857
        %v1859 = vpop.f32.mrb[0].mxu0
        %1860 = vmatprep.mubr.f32.mxu0 0.0
        %1861 = vmatmul.mubr.f32.gmra.mrb[0].mxu0 %v1744
        %v1862 = vpop.f32.mrb[0].mxu0
        %v1863 = vadd.f32 0.0, %v1862
        %v1864 = vpop.f32.mrb[0].mxu0
        %1865 = vmatprep.mubr.f32.mxu0 0.0
        %1866 = vmatmul.mubr.f32.gmra.mrb[0].mxu0 %v1745
        %v1867 = vpop.f32.mrb[0].mxu0
        %v1868 = vadd.f32 0.0, %v1867
        %v1869 = vpop.f32.mrb[0].mxu0
        %1870 = vmatprep.mubr.f32.mxu0 0.0
        %1871 = vmatmul.mubr.f32.gmra.mrb[0].mxu0 %v1746
        %v1872 = vpop.f32.mrb[0].mxu0
        %v1873 = vadd.f32 0.0, %v1872
        %v1874 = vpop.f32.mrb[0].mxu0
        %1875 = vmatprep.mubr.f32.mxu0 0.0
        %1876 = vmatmul.mubr.f32.gmra.mrb[0].mxu0 %v1747
        %v1877 = vpop.f32.mrb[0].mxu0
        %v1878 = vadd.f32 0.0, %v1877
        %v1879 = vpop.f32.mrb[0].mxu0
        %1880 = vmatprep.mubr.f32.mxu0 0.0
        %1881 = vmatmul.mubr.f32.gmra.mrb[0].mxu0 %v1748
        %v1882 = vpop.f32.mrb[0].mxu0
        %v1883 = vadd.f32 0.0, %v1882
        %v1884 = vpop.f32.mrb[0].mxu0
        %1885 = vmatprep.mubr.f32.mxu0 0.0
        %1886 = vmatmul.mubr.f32.gmra.mrb[0].mxu0 %v1749
        %v1887 = vpop.f32.mrb[0].mxu0
        %v1888 = vadd.f32 0.0, %v1887
        %v1889 = vpop.f32.mrb[0].mxu0
        %1890 = vmatprep.mubr.f32.mxu0 0.0
        %1891 = vmatmul.mubr.f32.gmra.mrb[0].mxu0 %v1750
        %v1892 = vpop.f32.mrb[0].mxu0
        %v1893 = vadd.f32 0.0, %v1892
        %v1894 = vpop.f32.mrb[0].mxu0
        %1895 = vmatprep.mubr.f32.mxu0 0.0
        %1896 = vmatmul.mubr.f32.gmra.mrb[0].mxu0 %v1751
        %v1897 = vpop.f32.mrb[0].mxu0
        %v1898 = vadd.f32 0.0, %v1897
        %v1899 = vpop.f32.mrb[0].mxu0
        %1900 = vmatprep.mubr.f32.mxu0 0.0
        %1901 = vmatmul.mubr.f32.gmra.mrb[0].mxu0 %v1752
        %v1902 = vpop.f32.mrb[0].mxu0
        %v1903 = vadd.f32 0.0, %v1902
        %v1904 = vpop.f32.mrb[0].mxu0
        %1905 = vmatprep.mubr.f32.mxu0 0.0
        %1906 = vmatmul.mubr.f32.gmra.mrb[0].mxu0 %v1753
        %v1907 = vpop.f32.mrb[0].mxu0
        %v1908 = vadd.f32 0.0, %v1907
        %v1909 = vpop.f32.mrb[0].mxu0
        %1910 = vmatprep.mubr.f32.mxu0 0.0
        %1911 = vmatmul.mubr.f32.gmra.mrb[0].mxu0 %v1754
        %v1912 = vpop.f32.mrb[0].mxu0
        %v1913 = vadd.f32 0.0, %v1912
        %v1914 = vpop.f32.mrb[0].mxu0
        %1915 = vdwg.mxu0
        %s1916 = smul.u32 %s26, 128
        %v1917 = vlaneseq
        %v1918 = vshrl.u32 %v1917, 7
        %v1919 = vadd.s32 %v1918, 8
        %v1920 = vadd.s32 %v1918, 16
        %v1921 = vadd.s32 %v1918, 24
        %v1922 = vadd.s32 %v1918, 32
        %v1923 = vadd.s32 %v1918, 40
        %v1924 = vadd.s32 %v1918, 48
        %v1925 = vadd.s32 %v1918, 56
        %v1926 = vadd.s32 %v1918, 64
        %v1927 = vadd.s32 %v1918, 72
        %v1928 = vadd.s32 %v1918, 80
        %v1929 = vadd.s32 %v1918, 88
        %v1930 = vadd.s32 %v1918, 96
        %v1931 = vadd.s32 %v1918, 104
        %v1932 = vadd.s32 %v1918, 112
        %v1933 = vadd.s32 %v1918, 120
        %v1934 = vstv %s1916
        %v1935 = vadd.s32 %v1934, %v1918
        %v1936 = vadd.s32 %v1934, %v1919
        %v1937 = vadd.s32 %v1934, %v1920
        %v1938 = vadd.s32 %v1934, %v1921
        %v1939 = vadd.s32 %v1934, %v1922
        %v1940 = vadd.s32 %v1934, %v1923
        %v1941 = vadd.s32 %v1934, %v1924
        %v1942 = vadd.s32 %v1934, %v1925
        %v1943 = vadd.s32 %v1934, %v1926
        %v1944 = vadd.s32 %v1934, %v1927
        %v1945 = vadd.s32 %v1934, %v1928
        %v1946 = vadd.s32 %v1934, %v1929
        %v1947 = vadd.s32 %v1934, %v1930
        %v1948 = vadd.s32 %v1934, %v1931
        %v1949 = vadd.s32 %v1934, %v1932
        %v1950 = vadd.s32 %v1934, %v1933
        %vm1951 = vcmp.lt.s32.totalorder %v1935, 300
        %vm1952 = vcmp.lt.s32.totalorder %v1936, 300
        %vm1953 = vcmp.lt.s32.totalorder %v1937, 300
        %vm1954 = vcmp.lt.s32.totalorder %v1938, 300
        %vm1955 = vcmp.lt.s32.totalorder %v1939, 300
        %vm1956 = vcmp.lt.s32.totalorder %v1940, 300
        %vm1957 = vcmp.lt.s32.totalorder %v1941, 300
        %vm1958 = vcmp.lt.s32.totalorder %v1942, 300
        %vm1959 = vcmp.lt.s32.totalorder %v1943, 300
        %vm1960 = vcmp.lt.s32.totalorder %v1944, 300
        %vm1961 = vcmp.lt.s32.totalorder %v1945, 300
        %vm1962 = vcmp.lt.s32.totalorder %v1946, 300
        %vm1963 = vcmp.lt.s32.totalorder %v1947, 300
        %vm1964 = vcmp.lt.s32.totalorder %v1948, 300
        %vm1965 = vcmp.lt.s32.totalorder %v1949, 300
        %vm1966 = vcmp.lt.s32.totalorder %v1950, 300
        %v1967 = vsel %vm1951, %v1838, -1e+30
        %v1968 = vsel %vm1952, %v1843, -1e+30
        %v1969 = vsel %vm1953, %v1848, -1e+30
        %v1970 = vsel %vm1954, %v1853, -1e+30
        %v1971 = vsel %vm1955, %v1858, -1e+30
        %v1972 = vsel %vm1956, %v1863, -1e+30
        %v1973 = vsel %vm1957, %v1868, -1e+30
        %v1974 = vsel %vm1958, %v1873, -1e+30
        %v1975 = vsel %vm1959, %v1878, -1e+30
        %v1976 = vsel %vm1960, %v1883, -1e+30
        %v1977 = vsel %vm1961, %v1888, -1e+30
        %v1978 = vsel %vm1962, %v1893, -1e+30
        %v1979 = vsel %vm1963, %v1898, -1e+30
        %v1980 = vsel %vm1964, %v1903, -1e+30
        %v1981 = vsel %vm1965, %v1908, -1e+30
        %v1982 = vsel %vm1966, %v1913, -1e+30
        %v1983 = vld [vmem:[#allocation2] sm:$0x1]
        %vm1984 = vcmask 7168
        %v1985 = vsel %vm1984, %v1967, -inf
        %v1986 = vsel %vm1984, %v1968, -inf
        %v1987 = vsel %vm1984, %v1969, -inf
        %v1988 = vsel %vm1984, %v1970, -inf
        %v1989 = vsel %vm1984, %v1971, -inf
        %v1990 = vmax.f32 %v1985, %v1989
        %v1991 = vsel %vm1984, %v1972, -inf
        %v1992 = vmax.f32 %v1986, %v1991
        %v1993 = vsel %vm1984, %v1973, -inf
        %v1994 = vmax.f32 %v1987, %v1993
        %v1995 = vsel %vm1984, %v1974, -inf
        %v1996 = vmax.f32 %v1988, %v1995
        %v1997 = vsel %vm1984, %v1975, -inf
        %v1998 = vmax.f32 %v1990, %v1997
        %v1999 = vsel %vm1984, %v1976, -inf
        %v2000 = vmax.f32 %v1992, %v1999
        %v2001 = vsel %vm1984, %v1977, -inf
        %v2002 = vmax.f32 %v1994, %v2001
        %v2003 = vsel %vm1984, %v1978, -inf
        %v2004 = vmax.f32 %v1996, %v2003
        %v2005 = vsel %vm1984, %v1979, -inf
        %v2006 = vmax.f32 %v1998, %v2005
        %v2007 = vsel %vm1984, %v1980, -inf
        %v2008 = vmax.f32 %v2000, %v2007
        %v2009 = vsel %vm1984, %v1981, -inf
        %v2010 = vmax.f32 %v2002, %v2009
        %v2011 = vsel %vm1984, %v1982, -inf
        %v2012 = vmax.f32 %v2004, %v2011
        %v2013 = vmax.f32 %v2006, %v2008
        %v2014 = vmax.f32 %v2010, %v2012
        %v2015 = vmax.f32 %v2013, %v2014
        %v2016 = vrot.slane %v2015, 4
        %v2017 = vmax.f32 %v2015, %v2016
        %v2018 = vrot.slane %v2017, 2
        %v2019 = vmax.f32 %v2017, %v2018
        %v2020 = vrot.slane %v2019, 1
        %v2021 = vmax.f32 %v2019, %v2020
        %v2022 = vmax.f32 %v1983, %v2021
        %v2023 = vsub.f32 %v1983, %v2022
        %v2024 = vmul.f32 %v2023, 1.442695
        %v2025 = vpow.pop %v2024
        %v2027 = vlaneseq
        %v2028 = vshrl.u32 %v2027, 7
        %v2029 = vsub.s32 0, %v2028
        %v2030 = vrot.slane %v2022, %v2029
        %v2032 = vsub.f32 %v1967, %v2030
        %v2033 = vsub.f32 %v1968, %v2030
        %v2034 = vsub.f32 %v1969, %v2030
        %v2035 = vsub.f32 %v1970, %v2030
        %v2036 = vsub.f32 %v1971, %v2030
        %v2037 = vsub.f32 %v1972, %v2030
        %v2038 = vsub.f32 %v1973, %v2030
        %v2039 = vsub.f32 %v1974, %v2030
        %v2040 = vsub.f32 %v1975, %v2030
        %v2041 = vsub.f32 %v1976, %v2030
        %v2042 = vsub.f32 %v1977, %v2030
        %v2043 = vsub.f32 %v1978, %v2030
        %v2044 = vsub.f32 %v1979, %v2030
        %v2045 = vsub.f32 %v1980, %v2030
        %v2046 = vsub.f32 %v1981, %v2030
        %v2047 = vsub.f32 %v1982, %v2030
        %v2048 = vmul.f32 %v2032, 1.442695
        %v2049 = vpow.pop %v2048
        %v2050 = vmul.f32 %v2033, 1.442695
        %v2051 = vpow.pop %v2050
        %v2052 = vmul.f32 %v2034, 1.442695
        %v2053 = vpow.pop %v2052
        %v2054 = vmul.f32 %v2035, 1.442695
        %v2055 = vpow.pop %v2054
        %v2056 = vmul.f32 %v2036, 1.442695
        %v2057 = vpow.pop %v2056
        %v2058 = vmul.f32 %v2037, 1.442695
        %v2059 = vpow.pop %v2058
        %v2060 = vmul.f32 %v2038, 1.442695
        %v2061 = vpow.pop %v2060
        %v2062 = vmul.f32 %v2039, 1.442695
        %v2063 = vpow.pop %v2062
        %v2064 = vmul.f32 %v2040, 1.442695
        %v2065 = vpow.pop %v2064
        %v2066 = vmul.f32 %v2041, 1.442695
        %v2067 = vpow.pop %v2066
        %v2068 = vmul.f32 %v2042, 1.442695
        %v2069 = vpow.pop %v2068
        %v2070 = vmul.f32 %v2043, 1.442695
        %v2071 = vpow.pop %v2070
        %v2072 = vmul.f32 %v2044, 1.442695
        %v2073 = vpow.pop %v2072
        %v2074 = vmul.f32 %v2045, 1.442695
        %v2075 = vpow.pop %v2074
        %v2076 = vmul.f32 %v2046, 1.442695
        %v2077 = vpow.pop %v2076
        %v2078 = vmul.f32 %v2047, 1.442695
        %v2079 = vpow.pop %v2078
        %v2080 = vld [vmem:[#allocation3] sm:$0x1]
        %v2081 = vmul.f32 %v2025, %v2080
        %v2082 = vsel %vm1984, %v2049, 0.0
        %v2083 = vsel %vm1984, %v2051, 0.0
        %v2084 = vadd.f32 %v2082, %v2083
        %v2085 = vsel %vm1984, %v2053, 0.0
        %v2086 = vadd.f32 %v2084, %v2085
        %v2087 = vsel %vm1984, %v2055, 0.0
        %v2088 = vadd.f32 %v2086, %v2087
        %v2089 = vsel %vm1984, %v2057, 0.0
        %v2090 = vadd.f32 %v2088, %v2089
        %v2091 = vsel %vm1984, %v2059, 0.0
        %v2092 = vadd.f32 %v2090, %v2091
        %v2093 = vsel %vm1984, %v2061, 0.0
        %v2094 = vadd.f32 %v2092, %v2093
        %v2095 = vsel %vm1984, %v2063, 0.0
        %v2096 = vadd.f32 %v2094, %v2095
        %v2097 = vsel %vm1984, %v2065, 0.0
        %v2098 = vadd.f32 %v2096, %v2097
        %v2099 = vsel %vm1984, %v2067, 0.0
        %v2100 = vadd.f32 %v2098, %v2099
        %v2101 = vsel %vm1984, %v2069, 0.0
        %v2102 = vadd.f32 %v2100, %v2101
        %v2103 = vsel %vm1984, %v2071, 0.0
        %v2104 = vadd.f32 %v2102, %v2103
        %v2105 = vsel %vm1984, %v2073, 0.0
        %v2106 = vadd.f32 %v2104, %v2105
        %v2107 = vsel %vm1984, %v2075, 0.0
        %v2108 = vadd.f32 %v2106, %v2107
        %v2109 = vsel %vm1984, %v2077, 0.0
        %v2110 = vadd.f32 %v2108, %v2109
        %v2111 = vsel %vm1984, %v2079, 0.0
        %v2112 = vadd.f32 %v2110, %v2111
        %v2113 = vrot.slane %v2112, 4
        %v2114 = vadd.f32 %v2112, %v2113
        %v2115 = vrot.slane %v2114, 2
        %v2116 = vadd.f32 %v2114, %v2115
        %v2117 = vrot.slane %v2116, 1
        %v2118 = vadd.f32 %v2116, %v2117
        %v2119 = vadd.f32 %v2081, %v2118
        %vm2120 = vcmask 0
        %2121 = vst.msk [vmem:[#allocation3] sm:$0x1] %vm2120, %v2119
        %2122 = vxpose.xlu0.b32.start [1/16] %v2049, 128
        %2123 = vxpose.xlu0.b32.cont [2/16] %v2051, 128
        %2124 = vxpose.xlu0.b32.cont [3/16] %v2053, 128
        %2125 = vxpose.xlu0.b32.cont [4/16] %v2055, 128
        %2126 = vxpose.xlu0.b32.cont [5/16] %v2057, 128
        %2127 = vxpose.xlu0.b32.cont [6/16] %v2059, 128
        %2128 = vxpose.xlu0.b32.cont [7/16] %v2061, 128
        %2129 = vxpose.xlu0.b32.cont [8/16] %v2063, 128
        %2130 = vxpose.xlu0.b32.cont [9/16] %v2065, 128
        %2131 = vxpose.xlu0.b32.cont [10/16] %v2067, 128
        %2132 = vxpose.xlu0.b32.cont [11/16] %v2069, 128
        %2133 = vxpose.xlu0.b32.cont [12/16] %v2071, 128
        %2134 = vxpose.xlu0.b32.cont [13/16] %v2073, 128
        %2135 = vxpose.xlu0.b32.cont [14/16] %v2075, 128
        %2136 = vxpose.xlu0.b32.cont [15/16] %v2077, 128
        %2137 = vxpose.xlu0.b32.end [16/16] %v2079, 128
        %v2138 = vpop.trf.xlu0
        %v2139 = vpop.trf.xlu0
        %v2140 = vpop.trf.xlu0
        %v2141 = vpop.trf.xlu0
        %v2142 = vpop.trf.xlu0
        %v2143 = vpop.trf.xlu0
        %v2144 = vpop.trf.xlu0
        %v2145 = vpop.trf.xlu0
        %v2146 = vpop.trf.xlu0
        %v2147 = vpop.trf.xlu0
        %v2148 = vpop.trf.xlu0
        %v2149 = vpop.trf.xlu0
        %v2150 = vpop.trf.xlu0
        %v2151 = vpop.trf.xlu0
        %v2152 = vpop.trf.xlu0
        %v2153 = vpop.trf.xlu0
        %2154 = vmatprep.subr.mxu0 %v1359
        %2155 = vmatpush1.msra.mxu0 %v1358
        %2156 = vmatprep.subr.mxu0 %v1361
        %2157 = vmatpush1.msra.mxu0 %v1360
        %2158 = vmatprep.subr.mxu0 %v1363
        %2159 = vmatpush1.msra.mxu0 %v1362
        %2160 = vmatprep.subr.mxu0 %v1365
        %2161 = vmatpush1.msra.mxu0 %v1364
        %2162 = vmatprep.subr.mxu0 %v1367
        %2163 = vmatpush1.msra.mxu0 %v1366
        %2164 = vmatprep.subr.mxu0 %v1369
        %2165 = vmatpush1.msra.mxu0 %v1368
        %2166 = vmatprep.subr.mxu0 %v1371
        %2167 = vmatpush1.msra.mxu0 %v1370
        %2168 = vmatprep.subr.mxu0 %v1373
        %2169 = vmatpush1.msra.mxu0 %v1372
        %2170 = vmatprep.subr.mxu0 %v1375
        %2171 = vmatpush1.msra.mxu0 %v1374
        %2172 = vmatprep.subr.mxu0 %v1377
        %2173 = vmatpush1.msra.mxu0 %v1376
        %2174 = vmatprep.subr.mxu0 %v1379
        %2175 = vmatpush1.msra.mxu0 %v1378
        %2176 = vmatprep.subr.mxu0 %v1381
        %2177 = vmatpush1.msra.mxu0 %v1380
        %2178 = vmatprep.subr.mxu0 %v1383
        %2179 = vmatpush1.msra.mxu0 %v1382
        %2180 = vmatprep.subr.mxu0 %v1385
        %2181 = vmatpush1.msra.mxu0 %v1384
        %2182 = vmatprep.subr.mxu0 %v1387
        %2183 = vmatpush1.msra.mxu0 %v1386
        %2184 = vmatprep.subr.mxu0 %v1389
        %2185 = vmatpush1.msra.mxu0 %v1388
        %2186 = vmatprep.subr.mxu0 0.0
        %2187 = vmatpush1.msra.mxu0 0.0
        %2188 = vmatprep.subr.mxu0 0.0
        %2189 = vmatpush1.msra.mxu0 0.0
        %2190 = vmatprep.subr.mxu0 0.0
        %2191 = vmatpush1.msra.mxu0 0.0
        %2192 = vmatprep.subr.mxu0 0.0
        %2193 = vmatpush1.msra.mxu0 0.0
        %2194 = vmatprep.subr.mxu0 0.0
        %2195 = vmatpush1.msra.mxu0 0.0
        %2196 = vmatprep.subr.mxu0 0.0
        %2197 = vmatpush1.msra.mxu0 0.0
        %2198 = vmatprep.subr.mxu0 0.0
        %2199 = vmatpush1.msra.mxu0 0.0
        %2200 = vmatprep.subr.mxu0 0.0
        %2201 = vmatpush1.msra.mxu0 0.0
        %2202 = vmatprep.subr.mxu0 0.0
        %2203 = vmatpush1.msra.mxu0 0.0
        %2204 = vmatprep.subr.mxu0 0.0
        %2205 = vmatpush1.msra.mxu0 0.0
        %2206 = vmatprep.subr.mxu0 0.0
        %2207 = vmatpush1.msra.mxu0 0.0
        %2208 = vmatprep.subr.mxu0 0.0
        %2209 = vmatpush1.msra.mxu0 0.0
        %2210 = vmatprep.subr.mxu0 0.0
        %2211 = vmatpush1.msra.mxu0 0.0
        %2212 = vmatprep.subr.mxu0 0.0
        %2213 = vmatpush1.msra.mxu0 0.0
        %2214 = vmatprep.subr.mxu0 0.0
        %2215 = vmatpush1.msra.mxu0 0.0
        %2216 = vmatprep.subr.mxu0 0.0
        %2217 = vmatpush1.msra.mxu0 0.0
        %2218 = vmatprep.mubr.f32.mxu0 0.0
        %2219 = vmatmul.mubr.f32.gmra.mrb[0].mxu0 %v2138
        %v2220 = vpop.f32.mrb[0].mxu0
        %v2221 = vadd.f32 0.0, %v2220
        %v2222 = vpop.f32.mrb[0].mxu0
        %v2223 = vadd.f32 0.0, %v2222
        %2224 = vdwg.mxu0
        %v2225 = vld [vmem:[#allocation4] sm:$0x3]
        %2227 = vset.pattern.permute.xlu0 0
        %2228 = vperm.xlu0 %2227, %v2025
        %v2229 = vpop.permute.xlu0 %2228
        %v2231 = vlaneseq
        %v2232 = vshrl.u32 %v2231, 7
        %v2233 = vsub.s32 0, %v2232
        %v2234 = vrot.slane %v2229, %v2233
        %v2235 = vmul.f32 %v2234, %v2225
        %v2238 = vcombine.low %v2221, %v2223
        %v2240 = vunpack.c.l.s4 1966171168
        %v2241 = vunpack.c.0.s8 %v2240
        %v2242 = vlaneseq
        %v2243 = vshrl.u32 %v2242, 7
        %v2244 = vsub.s32 %v2241, %v2243
        %v2245 = vrot.slane %v2238, %v2244
        %v2247 = vunpack.c.l.s4 1966171168
        %v2248 = vunpack.c.0.s8 %v2247
        %v2249 = vlaneseq
        %v2250 = vshrl.u32 %v2249, 7
        %v2251 = vsub.s32 %v2248, %v2250
        %v2252 = vrot.slane %v2245, %v2251
        %v2254 = vadd.f32 %v2235, %v2252
        %v2255 = vlaneseq
        %vm2256 = vcmp.ge.s32.totalorder %v2255, 0
        %vm2257 = vcmp.lt.s32.totalorder %v2255, 256
        %vm2258 = vmand %vm2256, %vm2257
        %2259 = vst.msk [vmem:[#allocation4] sm:$0x3] %vm2258, %v2254
        %2260 = vst.msk [vmem:[#allocation2] sm:$0x1] %vm2120, %v2022
        %p2261 = scmp.eq.s32.totalorder %s26, 2
        // Predicated region
        $region57: #{snnmil_forward.1} parent=51 // pred_check
          %p2262 = pneg %p2261
        $region58: #{snnmil_forward.1} parent=51 // pred_check_branch
          %2264 = sbr.rel (%p2262) target = $region60
        $region59: #{snnmil_forward.1} parent=51 // pred_region
          %v2265 = vld [vmem:[#allocation4] sm:$0x3]
          %v2266 = vld [vmem:[#allocation3] sm:$0x1]
          %2268 = vset.pattern.permute.xlu0 0
          %2269 = vperm.xlu0 %2268, %v2266
          %v2270 = vpop.permute.xlu0 %2269
          %v2272 = vlaneseq
          %v2273 = vshrl.u32 %v2272, 7
          %v2274 = vsub.s32 0, %v2273
          %v2275 = vrot.slane %v2270, %v2274
          %v2276 = vrcp.pop %v2275
          %v2277 = vmul.f32 %v2265, %v2276
          %2278 = vst.msk [vmem:[#allocation10] sm:$0x3] %vm2258, %v2277
          %v2279 = vld [vmem:[%s6] sm:$0xff]
          %v2280 = vld [vmem:[%s6 + $0x8] sm:$0xff]
          %v2281 = vld [vmem:[%s6 + $0x10] sm:$0xff]
          %v2282 = vld [vmem:[%s6 + $0x18] sm:$0xff]
          %v2283 = vld [vmem:[%s6 + $0x20] sm:$0xff]
          %v2284 = vld [vmem:[%s6 + $0x28] sm:$0xff]
          %v2285 = vld [vmem:[%s6 + $0x30] sm:$0xff]
          %v2286 = vld [vmem:[%s6 + $0x38] sm:$0xff]
          %v2287 = vld [vmem:[%s6 + $0x40] sm:$0xff]
          %v2288 = vld [vmem:[%s6 + $0x48] sm:$0xff]
          %v2289 = vld [vmem:[%s6 + $0x50] sm:$0xff]
          %v2290 = vld [vmem:[%s6 + $0x58] sm:$0xff]
          %v2291 = vld [vmem:[%s6 + $0x60] sm:$0xff]
          %v2292 = vld [vmem:[%s6 + $0x68] sm:$0xff]
          %v2293 = vld [vmem:[%s6 + $0x70] sm:$0xff]
          %v2294 = vld [vmem:[%s6 + $0x78] sm:$0xff]
          %v2295 = vld [vmem:[%s6 + $0x80] sm:$0xff]
          %v2296 = vld [vmem:[%s6 + $0x88] sm:$0xff]
          %v2297 = vld [vmem:[%s6 + $0x90] sm:$0xff]
          %v2298 = vld [vmem:[%s6 + $0x98] sm:$0xff]
          %v2299 = vld [vmem:[%s6 + $0xa0] sm:$0xff]
          %v2300 = vld [vmem:[%s6 + $0xa8] sm:$0xff]
          %v2301 = vld [vmem:[%s6 + $0xb0] sm:$0xff]
          %v2302 = vld [vmem:[%s6 + $0xb8] sm:$0xff]
          %v2303 = vld [vmem:[%s6 + $0xc0] sm:$0xff]
          %v2304 = vld [vmem:[%s6 + $0xc8] sm:$0xff]
          %v2305 = vld [vmem:[%s6 + $0xd0] sm:$0xff]
          %v2306 = vld [vmem:[%s6 + $0xd8] sm:$0xff]
          %v2307 = vld [vmem:[%s6 + $0xe0] sm:$0xff]
          %v2308 = vld [vmem:[%s6 + $0xe8] sm:$0xff]
          %v2309 = vld [vmem:[%s6 + $0xf0] sm:$0xff]
          %v2310 = vld [vmem:[%s6 + $0xf8] sm:$0xff]
          %v2311 = vld [vmem:[%s7] sm:$0x1]
          %v2313 = vlaneseq
          %v2314 = vshrl.u32 %v2313, 7
          %v2315 = vsub.s32 0, %v2314
          %v2316 = vrot.slane %v2277, %v2315
          %v2317 = vlaneseq
          %v2318 = vshrl.u32 %v2317, 7
          %v2319 = vsub.s32 1, %v2318
          %v2320 = vrot.slane %v2277, %v2319
          %2323 = vmatprep.subr.mxu0 0.0
          %2324 = vmatpush1.msra.mxu0 %v2279
          %2325 = vmatprep.subr.mxu0 0.0
          %2326 = vmatpush1.msra.mxu0 %v2280
          %2327 = vmatprep.subr.mxu0 0.0
          %2328 = vmatpush1.msra.mxu0 %v2281
          %2329 = vmatprep.subr.mxu0 0.0
          %2330 = vmatpush1.msra.mxu0 %v2282
          %2331 = vmatprep.subr.mxu0 0.0
          %2332 = vmatpush1.msra.mxu0 %v2283
          %2333 = vmatprep.subr.mxu0 0.0
          %2334 = vmatpush1.msra.mxu0 %v2284
          %2335 = vmatprep.subr.mxu0 0.0
          %2336 = vmatpush1.msra.mxu0 %v2285
          %2337 = vmatprep.subr.mxu0 0.0
          %2338 = vmatpush1.msra.mxu0 %v2286
          %2339 = vmatprep.subr.mxu0 0.0
          %2340 = vmatpush1.msra.mxu0 %v2287
          %2341 = vmatprep.subr.mxu0 0.0
          %2342 = vmatpush1.msra.mxu0 %v2288
          %2343 = vmatprep.subr.mxu0 0.0
          %2344 = vmatpush1.msra.mxu0 %v2289
          %2345 = vmatprep.subr.mxu0 0.0
          %2346 = vmatpush1.msra.mxu0 %v2290
          %2347 = vmatprep.subr.mxu0 0.0
          %2348 = vmatpush1.msra.mxu0 %v2291
          %2349 = vmatprep.subr.mxu0 0.0
          %2350 = vmatpush1.msra.mxu0 %v2292
          %2351 = vmatprep.subr.mxu0 0.0
          %2352 = vmatpush1.msra.mxu0 %v2293
          %2353 = vmatprep.subr.mxu0 0.0
          %2354 = vmatpush1.msra.mxu0 %v2294
          %2355 = vmatprep.subr.mxu0 0.0
          %2356 = vmatpush1.msra.mxu0 %v2295
          %2357 = vmatprep.subr.mxu0 0.0
          %2358 = vmatpush1.msra.mxu0 %v2296
          %2359 = vmatprep.subr.mxu0 0.0
          %2360 = vmatpush1.msra.mxu0 %v2297
          %2361 = vmatprep.subr.mxu0 0.0
          %2362 = vmatpush1.msra.mxu0 %v2298
          %2363 = vmatprep.subr.mxu0 0.0
          %2364 = vmatpush1.msra.mxu0 %v2299
          %2365 = vmatprep.subr.mxu0 0.0
          %2366 = vmatpush1.msra.mxu0 %v2300
          %2367 = vmatprep.subr.mxu0 0.0
          %2368 = vmatpush1.msra.mxu0 %v2301
          %2369 = vmatprep.subr.mxu0 0.0
          %2370 = vmatpush1.msra.mxu0 %v2302
          %2371 = vmatprep.subr.mxu0 0.0
          %2372 = vmatpush1.msra.mxu0 %v2303
          %2373 = vmatprep.subr.mxu0 0.0
          %2374 = vmatpush1.msra.mxu0 %v2304
          %2375 = vmatprep.subr.mxu0 0.0
          %2376 = vmatpush1.msra.mxu0 %v2305
          %2377 = vmatprep.subr.mxu0 0.0
          %2378 = vmatpush1.msra.mxu0 %v2306
          %2379 = vmatprep.subr.mxu0 0.0
          %2380 = vmatpush1.msra.mxu0 %v2307
          %2381 = vmatprep.subr.mxu0 0.0
          %2382 = vmatpush1.msra.mxu0 %v2308
          %2383 = vmatprep.subr.mxu0 0.0
          %2384 = vmatpush1.msra.mxu0 %v2309
          %2385 = vmatprep.subr.mxu0 0.0
          %2386 = vmatpush1.msra.mxu0 %v2310
          %2387 = vmatprep.mubr.f32.mxu0 %v2320
          %2388 = vmatmul.mubr.f32.gmra.mrb[0].mxu0 %v2316
          %v2389 = vpop.f32.mrb[0].mxu0
          %v2390 = vadd.f32 %v2311, %v2389
          %v2391 = vpop.f32.mrb[0].mxu0
          %2392 = vdwg.mxu0
          %vm2393 = vcmask 8192
          %2394 = vst.msk [vmem:[#allocation5] sm:$0x1] %vm2393, %v2390
          %v2395 = vsel %vm2393, %v2390, -inf
          %2396 = vmax.xlane.f32.xlu0 %v2395
          %v2397 = vpop.xlane.xlu0 %2396
          %v2398 = vsub.f32 %v2390, %v2397
          %v2399 = vmul.f32 %v2398, 1.442695
          %v2400 = vpow.pop %v2399
          %v2401 = vsel %vm2393, %v2400, 0.0
          %2402 = vadd.xlane.f32.xlu0 %v2401
          %v2403 = vpop.xlane.xlu0 %2402
          %v2404 = vrcp.pop %v2403
          %v2405 = vmul.f32 %v2400, %v2404
          %2406 = vst.msk [vmem:[#allocation7] sm:$0x1] %vm2393, %v2405
          %v2407 = vlaneseq
          %v2408 = vand.u32 %v2407, 127
          %vm2409 = vcmp.eq.f32.partialorder %v2390, %v2397
          %v2410 = vsel %vm2409, %v2408, 2
          %v2411 = vsel %vm2393, %v2410, 2147483647
          %v2412 = vand.u32 %v2411, 65535
          %v2413 = vshra.s32 %v2411, 16
          %v2414 = vcvt.s32.f32 %v2412
          %v2415 = vcvt.s32.f32 %v2413
          %2416 = vmin.xlane.f32.xlu0 %v2415
          %v2417 = vpop.xlane.xlu0 %2416
          %vm2418 = vcmp.eq.f32.partialorder %v2415, %v2417
          %v2419 = vsel %vm2418, %v2414, inf
          %2420 = vmin.xlane.f32.xlu0 %v2419
          %v2421 = vpop.xlane.xlu0 %2420
          %v2422 = vcvt.f32.s32 %v2421
          %v2423 = vcvt.f32.s32 %v2417
          %v2424 = vshll.u32 %v2423, 16
          %v2425 = vadd.s32 %v2424, %v2422
          %2426 = vst.msk [vmem:[#allocation9] sm:$0x1] %vm2120, %v2425
        $region60: #{snnmil_forward.1} parent=51 // pred_fallthru
          _
        // Predicated region
        $region61: #{snnmil_forward.1} parent=51 // pred_check
          %p2427 = pneg %p212
        $region62: #{snnmil_forward.1} parent=51 // pred_check_branch
          %2429 = sbr.rel (%p2427) target = $region64
        $region63: #{snnmil_forward.1} parent=51 // pred_region
          %s2431 = ssub.s32 16, 16
          %2432 = vsyncadd [#allocation6], %s2431
          %s2434 = sshll.u32 [#allocation5], 4
          %s2435 = int_to_ptr.vmem [resolvable:$true] %s2434
          %2437 = dma.vmem_to_hbm [thread:$0]  %s2435, 16, %s8, [#allocation6]
        $region64: #{snnmil_forward.1} parent=51 // pred_fallthru
          _
        // Predicated region
        $region65: #{snnmil_forward.1} parent=51 // pred_check
          %p2438 = pneg %p233
        $region66: #{snnmil_forward.1} parent=51 // pred_check_branch
          %2440 = sbr.rel (%p2438) target = $region68
        $region67: #{snnmil_forward.1} parent=51 // pred_region
          %s2442 = ssub.s32 16, 16
          %2443 = vsyncadd [#allocation8], %s2442
          %s2445 = sshll.u32 [#allocation7], 4
          %s2446 = int_to_ptr.vmem [resolvable:$true] %s2445
          %2448 = dma.vmem_to_hbm [thread:$0]  %s2446, 16, %s9, [#allocation8]
        $region68: #{snnmil_forward.1} parent=51 // pred_fallthru
          _
        // Predicated region
        $region69: #{snnmil_forward.1} parent=51 // pred_check
          %p2449 = pneg %p254
        $region70: #{snnmil_forward.1} parent=51 // pred_check_branch
          %2451 = sbr.rel (%p2449) target = $region72
        $region71: #{snnmil_forward.1} parent=51 // pred_region
          %s2453 = ssub.s32 16, 16
          %2454 = vsyncadd [#allocation8], %s2453
          %s2456 = sshll.u32 [#allocation9], 4
          %s2457 = int_to_ptr.vmem [resolvable:$true] %s2456
          %2459 = dma.vmem_to_hbm [thread:$0]  %s2457, 16, %s10, [#allocation8]
        $region72: #{snnmil_forward.1} parent=51 // pred_fallthru
          _
        // Predicated region
        $region73: #{snnmil_forward.1} parent=51 // pred_check
          %p2460 = pneg %p275
        $region74: #{snnmil_forward.1} parent=51 // pred_check_branch
          %2462 = sbr.rel (%p2460) target = $region76
        $region75: #{snnmil_forward.1} parent=51 // pred_region
          %s2464 = ssub.s32 32, 32
          %2465 = vsyncadd [#allocation11], %s2464
          %s2467 = sshll.u32 [#allocation10], 4
          %s2468 = int_to_ptr.vmem [resolvable:$true] %s2467
          %2470 = dma.vmem_to_hbm [thread:$0]  %s2468, 32, %s11, [#allocation11]
        $region76: #{snnmil_forward.1} parent=51 // pred_fallthru
          _
        // Predicated region
        $region77: #{snnmil_forward.1} parent=51 // pred_check
          %p2471 = pneg %p212
        $region78: #{snnmil_forward.1} parent=51 // pred_check_branch
          %2473 = sbr.rel (%p2471) target = $region80
        $region79: #{snnmil_forward.1} parent=51 // pred_region
          %2474 = dma.done [#allocation6], 16
        $region80: #{snnmil_forward.1} parent=51 // pred_fallthru
          _
        // Predicated region
        $region81: #{snnmil_forward.1} parent=51 // pred_check
          %p2475 = pneg %p233
        $region82: #{snnmil_forward.1} parent=51 // pred_check_branch
          %2477 = sbr.rel (%p2475) target = $region84
        $region83: #{snnmil_forward.1} parent=51 // pred_region
          %2478 = dma.done [#allocation8], 16
        $region84: #{snnmil_forward.1} parent=51 // pred_fallthru
          _
        // Predicated region
        $region85: #{snnmil_forward.1} parent=51 // pred_check
          %p2479 = pneg %p254
        $region86: #{snnmil_forward.1} parent=51 // pred_check_branch
          %2481 = sbr.rel (%p2479) target = $region88
        $region87: #{snnmil_forward.1} parent=51 // pred_region
          %2482 = dma.done [#allocation8], 16
        $region88: #{snnmil_forward.1} parent=51 // pred_fallthru
          _
        // Predicated region
        $region89: #{snnmil_forward.1} parent=51 // pred_check
          %p2483 = pneg %p275
        $region90: #{snnmil_forward.1} parent=51 // pred_check_branch
          %2485 = sbr.rel (%p2483) target = $region92
        $region91: #{snnmil_forward.1} parent=51 // pred_region
          %2486 = dma.done [#allocation11], 32
        $region92: #{snnmil_forward.1} parent=51 // pred_fallthru
          _
      $region52: #{snnmil_forward.1} parent=5 // pred_fallthru
        _
      %p2487 = scmp.le.s32.totalorder 2, %s21
      // Predicated region
      $region93: #{snnmil_forward.1} parent=5 // pred_check
        %p2488 = pneg %p2487
      $region94: #{snnmil_forward.1} parent=5 // pred_check_branch
        %2490 = sbr.rel (%p2488) target = $region96
      $region95: #{snnmil_forward.1} parent=5 // pred_region
        %s2491 = ssub.s32 %s21, 2
      $region96: #{snnmil_forward.1} parent=5 // pred_fallthru
        _
    $region6: #{snnmil_forward.1} parent=1 // loop_footer
      %s25 = sadd.s32 1, %s21
    $region7: #{snnmil_forward.1} parent=1 // loop_footer_branch
      %20 = sbr.rel target = $region3
    $region8: #{snnmil_forward.1} parent=1 // loop_exit
      _
    %2492 = vsyncpa [#allocation6], 1
    %s2493 = scalar_lea.sflag [#allocation6], 1
    %2494 = vsyncpa %s2493, 1
    %2495 = vsyncpa [#allocation8], 1
    %2496 = vsyncpa [#allocation11], 1

</llo_original>
